<compile_context>
chip_gen: v6e
topology: v6e:2x2x1
jax: 0.10.0
libtpu: 0.0.40
codegen_flags: <defaults>
</compile_context>

<pallas_src>
import math

import jax
import jax.numpy as jnp
from jax import lax
from jax.experimental import pallas as pl
from jax.experimental.pallas import tpu as pltpu


# ---------------------------------------------------------------------------
# Generic linear:  y = x @ W + b      (output projection / fallback path)
# ---------------------------------------------------------------------------
def _linear_kernel(x_ref, w_ref, b_ref, o_ref):
    # x_ref: (1, tm, Din)  w_ref: (Din, Dout)  b_ref: (1, Dout)  o_ref: (1, tm, Dout)
    y = jnp.dot(x_ref[0], w_ref[...], preferred_element_type=jnp.float32)
    o_ref[0] = (y + b_ref[...]).astype(o_ref.dtype)


def pallas_linear(x, w, b, *, s_tile=256):
    B, S, Din = x.shape
    Dout = w.shape[1]
    tm = min(s_tile, S)
    assert S % tm == 0, "S must be divisible by the sequence tile"
    return pl.pallas_call(
        _linear_kernel,
        out_shape=jax.ShapeDtypeStruct((B, S, Dout), x.dtype),
        grid=(B, S // tm),
        in_specs=[
            pl.BlockSpec((1, tm, Din), lambda b, si: (b, si, 0)),
            pl.BlockSpec((Din, Dout), lambda b, si: (0, 0)),
            pl.BlockSpec((1, Dout), lambda b, si: (0, 0)),
        ],
        out_specs=pl.BlockSpec((1, tm, Dout), lambda b, si: (b, si, 0)),
        compiler_params=pltpu.CompilerParams(
            dimension_semantics=("parallel", "parallel")),
    )(x, w, b.reshape(1, Dout))


# ---------------------------------------------------------------------------
# Fused Q/K/V projection (self-attention fast path): one read of x,
# concatenated (Din, 3*Din) weight, three lane-dense outputs.
# ---------------------------------------------------------------------------
def _qkv_proj_kernel(x_ref, w_ref, b_ref, q_ref, k_ref, v_ref):
    # x_ref: (1, tm, D)  w_ref: (D, 3D)  b_ref: (1, 3D)  q/k/v_ref: (1, tm, D)
    d = q_ref.shape[-1]
    y = jnp.dot(x_ref[0], w_ref[...], preferred_element_type=jnp.float32)
    y = (y + b_ref[...]).astype(q_ref.dtype)
    q_ref[0] = y[:, 0:d]
    k_ref[0] = y[:, d:2 * d]
    v_ref[0] = y[:, 2 * d:3 * d]


def pallas_qkv_proj(x, w_qkv, b_qkv, *, s_tile=256):
    B, S, D = x.shape
    assert w_qkv.shape == (D, 3 * D)
    tm = min(s_tile, S)
    assert S % tm == 0, "S must be divisible by the sequence tile"
    out = jax.ShapeDtypeStruct((B, S, D), x.dtype)
    return pl.pallas_call(
        _qkv_proj_kernel,
        out_shape=(out, out, out),
        grid=(B, S // tm),
        in_specs=[
            pl.BlockSpec((1, tm, D), lambda b, si: (b, si, 0)),
            pl.BlockSpec((D, 3 * D), lambda b, si: (0, 0)),
            pl.BlockSpec((1, 3 * D), lambda b, si: (0, 0)),
        ],
        out_specs=(
            pl.BlockSpec((1, tm, D), lambda b, si: (b, si, 0)),
            pl.BlockSpec((1, tm, D), lambda b, si: (b, si, 0)),
            pl.BlockSpec((1, tm, D), lambda b, si: (b, si, 0)),
        ),
        compiler_params=pltpu.CompilerParams(
            dimension_semantics=("parallel", "parallel")),
    )(x, w_qkv, b_qkv.reshape(1, 3 * D))


# ---------------------------------------------------------------------------
# Flash attention: grid (B, h, q-tiles, kv-tiles), online softmax in scratch.
# q is pre-scaled by 1/sqrt(d_k) (folded into the Q projection weights).
# ---------------------------------------------------------------------------
def _flash_attn_kernel(q_ref, k_ref, v_ref, o_ref, m_sc, l_sc, acc_sc):
    ki = pl.program_id(3)

    @pl.when(ki == 0)
    def _init():
        m_sc[...] = jnp.full_like(m_sc, -jnp.inf)
        l_sc[...] = jnp.zeros_like(l_sc)
        acc_sc[...] = jnp.zeros_like(acc_sc)

    q = q_ref[0]          # (tq, d_k) native dtype — MXU accumulates in f32
    k = k_ref[0]          # (tk, d_k)
    v = v_ref[0]          # (tk, d_k)

    # scores = q @ k^T  (contraction over d_k on both operands; no explicit
    # materialized transpose of K).
    s = lax.dot_general(q, k, (((1,), (1,)), ((), ())),
                        preferred_element_type=jnp.float32)     # (tq, tk) f32

    m_prev = m_sc[...]                                           # (tq, 1)
    m_new = jnp.maximum(m_prev, jnp.max(s, axis=-1, keepdims=True))
    alpha = jnp.exp(m_prev - m_new)                              # (tq, 1)
    p = jnp.exp(s - m_new)                                       # (tq, tk)
    # TODO(synk): mask / dropout on p would be applied here.

    l_sc[...] = alpha * l_sc[...] + jnp.sum(p, axis=-1, keepdims=True)
    acc_sc[...] = alpha * acc_sc[...] + jnp.dot(
        p.astype(v.dtype), v, preferred_element_type=jnp.float32)
    m_sc[...] = m_new

    @pl.when(ki == pl.num_programs(3) - 1)
    def _finalize():
        inv_l = pl.reciprocal(l_sc[...], approx=True)            # EUP, ~free
        o_ref[0] = (acc_sc[...] * inv_l).astype(o_ref.dtype)


def pallas_flash_attention(q, k, v, h, *, q_tile=256, kv_tile=512):
    """q/k/v: (B, S, h*d_k) with heads packed along the feature axis.
       Returns (B, S, h*d_k) in the same packed layout."""
    B, Sq, D = q.shape
    Skv = k.shape[1]
    d_k = D // h
    assert D % h == 0 and d_k % 128 == 0, "lane-aligned heads required"
    tq = min(q_tile, Sq)
    tk = min(kv_tile, Skv)
    assert Sq % tq == 0 and Skv % tk == 0
    grid = (B, h, Sq // tq, Skv // tk)
    return pl.pallas_call(
        _flash_attn_kernel,
        out_shape=jax.ShapeDtypeStruct((B, Sq, D), q.dtype),
        grid=grid,
        in_specs=[
            pl.BlockSpec((1, tq, d_k), lambda b, hd, qi, ki: (b, qi, hd)),
            pl.BlockSpec((1, tk, d_k), lambda b, hd, qi, ki: (b, ki, hd)),
            pl.BlockSpec((1, tk, d_k), lambda b, hd, qi, ki: (b, ki, hd)),
        ],
        out_specs=pl.BlockSpec((1, tq, d_k), lambda b, hd, qi, ki: (b, qi, hd)),
        scratch_shapes=[
            pltpu.VMEM((tq, 1), jnp.float32),     # running max  m_i
            pltpu.VMEM((tq, 1), jnp.float32),     # running sum  l_i
            pltpu.VMEM((tq, d_k), jnp.float32),   # un-normalized accumulator
        ],
        compiler_params=pltpu.CompilerParams(
            dimension_semantics=("parallel", "parallel", "parallel", "arbitrary")),
    )(q, k, v)


# ---------------------------------------------------------------------------
# MultiHeadedAttention forward
# ---------------------------------------------------------------------------
def multi_headed_attention(params, query, key, value, h):
    """params: dict with w_q,b_q,w_k,b_k,w_v,b_v,w_o,b_o (weights as (in,out)).
       query/key/value: (B, S, d_model) -> (B, S, d_model)."""
    B, S, d_model = query.shape
    d_k = d_model // h
    scale = 1.0 / math.sqrt(d_k)

    # Fold the 1/sqrt(d_k) softmax scale into the Q projection (exact).
    w_q = params["w_q"] * scale
    b_q = params["b_q"] * scale

    if (query is key) and (key is value):
        # Self-attention: fused QKV projection — one read of the activation.
        w_qkv = jnp.concatenate([w_q, params["w_k"], params["w_v"]], axis=1)
        b_qkv = jnp.concatenate([b_q, params["b_k"], params["b_v"]])
        q, k, v = pallas_qkv_proj(query, w_qkv, b_qkv)
    else:
        q = pallas_linear(query, w_q, b_q)
        k = pallas_linear(key, params["w_k"], params["b_k"])
        v = pallas_linear(value, params["w_v"], params["b_v"])

    # Heads stay packed along the feature axis — no split/merge transposes;
    # the attention BlockSpec index_map selects head columns directly.
    x = pallas_flash_attention(q, k, v, h)       # (B, S, d_model)
    return pallas_linear(x, params["w_o"], params["b_o"])


def init_params(key, d_model, dtype=jnp.float32):
    """Linear weights stored as (in, out) (transpose of PyTorch's (out, in))."""
    keys = jax.random.split(key, 8)
    bound = 1.0 / math.sqrt(d_model)
    def w(k):
        return jax.random.uniform(k, (d_model, d_model), dtype,
                                  minval=-bound, maxval=bound)
    def b(k):
        return jax.random.uniform(k, (d_model,), dtype,
                                  minval=-bound, maxval=bound)
    return {
        "w_q": w(keys[0]), "b_q": b(keys[1]),
        "w_k": w(keys[2]), "b_k": b(keys[3]),
        "w_v": w(keys[4]), "b_v": b(keys[5]),
        "w_o": w(keys[6]), "b_o": b(keys[7]),
    }


# ---------------------------------------------------------------------------
# Pure-JAX reference (mirrors the PyTorch module, eval mode, mask=None)
# ---------------------------------------------------------------------------
def ref_forward(p, q, k, v, h):
    B, S, d_model = q.shape
    d_k = d_model // h
    def lin(x, w, b): return x @ w + b
    def split(x): return x.reshape(B, -1, h, d_k).transpose(0, 2, 1, 3)
    Q = split(lin(q, p["w_q"], p["b_q"]))
    K = split(lin(k, p["w_k"], p["b_k"]))
    V = split(lin(v, p["w_v"], p["b_v"]))
    s = jnp.einsum("bhqd,bhkd->bhqk", Q, K) / math.sqrt(d_k)
    pa = jax.nn.softmax(s, axis=-1)
    x = jnp.einsum("bhqk,bhkd->bhqd", pa, V)
    x = x.transpose(0, 2, 1, 3).reshape(B, -1, d_model)
    return lin(x, p["w_o"], p["b_o"])


if __name__ == "__main__":
    # Small but TPU-tile-friendly shapes: heads are lane-aligned (d_k = 128).
    B, S, d_model, h = 2, 128, 256, 2

    root = jax.random.PRNGKey(0)
    k_params, k_q, k_k, k_v = jax.random.split(root, 4)
    params = init_params(k_params, d_model)

    x_in = jax.random.normal(k_q, (B, S, d_model), jnp.float32)

    # 1) self-attention path (query is key is value) -> fused QKV projection
    out = multi_headed_attention(params, x_in, x_in, x_in, h)
    out = jax.block_until_ready(out)
    ref = ref_forward(params, x_in, x_in, x_in, h)
    assert out.shape == (B, S, d_model)
    assert jnp.allclose(out, ref, atol=2e-3, rtol=2e-3)

    # 2) cross-attention path (distinct q/k/v) -> separate projections
    k_in = jax.random.normal(k_k, (B, S, d_model), jnp.float32)
    v_in = jax.random.normal(k_v, (B, S, d_model), jnp.float32)
    out2 = jax.block_until_ready(
        multi_headed_attention(params, x_in, k_in, v_in, h))
    ref2 = ref_forward(params, x_in, k_in, v_in, h)
    assert jnp.allclose(out2, ref2, atol=2e-3, rtol=2e-3)

    print("KERNEL_OK")
</pallas_src>

<mosaic_0001>
module attributes {stable_mosaic.version = 11 : i64} {
  func.func @_qkv_proj_kernel(%arg0: i32, %arg1: i32, %arg2: memref<1x128x256xf32, #tpu.memory_space<vmem>>, %arg3: memref<256x768xf32, #tpu.memory_space<vmem>>, %arg4: memref<1x768xf32, #tpu.memory_space<vmem>>, %arg5: memref<1x128x256xf32, #tpu.memory_space<vmem>>, %arg6: memref<1x128x256xf32, #tpu.memory_space<vmem>>, %arg7: memref<1x128x256xf32, #tpu.memory_space<vmem>>) attributes {dimension_semantics = [#tpu.dimension_semantics<parallel>, #tpu.dimension_semantics<parallel>], iteration_bounds = array<i64: 2, 1>, scalar_prefetch = 0 : i64, scratch_operands = 0 : i64, tpu.core_type = #tpu.core_type<tc>, window_params = [{transform_indices = @transform_0, window_bounds = array<i64: 1, 128, 256>}, {pipeline_mode = #tpu.pipeline_mode<synchronous>, transform_indices = @transform_1, window_bounds = array<i64: 256, 768>}, {pipeline_mode = #tpu.pipeline_mode<synchronous>, transform_indices = @transform_2, window_bounds = array<i64: 1, 768>}, {transform_indices = @transform_3, window_bounds = array<i64: 1, 128, 256>}, {transform_indices = @transform_4, window_bounds = array<i64: 1, 128, 256>}, {transform_indices = @transform_5, window_bounds = array<i64: 1, 128, 256>}]} {
    %c0 = arith.constant 0 : index
    %c0_0 = arith.constant 0 : index
    %c0_1 = arith.constant 0 : index
    %0 = vector.load %arg2[%c0, %c0_0, %c0_1] : memref<1x128x256xf32, #tpu.memory_space<vmem>>, vector<1x128x256xf32>
    %1 = vector.shape_cast %0 : vector<1x128x256xf32> to vector<128x256xf32>
    %c0_2 = arith.constant 0 : index
    %c0_3 = arith.constant 0 : index
    %2 = vector.load %arg3[%c0_2, %c0_3] : memref<256x768xf32, #tpu.memory_space<vmem>>, vector<256x768xf32>
    %cst = arith.constant dense<0.000000e+00> : vector<128x768xf32>
    %3 = tpu.matmul %1, %2, %cst {dimension_numbers = #tpu.dot_dimension_numbers<[1], [0], [0], [1], [0, 0, 1, 1], [], []>} : vector<128x256xf32>, vector<256x768xf32>, vector<128x768xf32> -> vector<128x768xf32>
    %c0_4 = arith.constant 0 : index
    %c0_5 = arith.constant 0 : index
    %4 = vector.load %arg4[%c0_4, %c0_5] : memref<1x768xf32, #tpu.memory_space<vmem>>, vector<1x768xf32>
    %5 = vector.broadcast %4 : vector<1x768xf32> to vector<128x768xf32>
    %6 = arith.addf %3, %5 : vector<128x768xf32>
    %7 = vector.extract_strided_slice %6 {offsets = [0, 0], sizes = [128, 256], strides = [1, 1]} : vector<128x768xf32> to vector<128x256xf32>
    %c0_6 = arith.constant 0 : index
    %c0_7 = arith.constant 0 : index
    %c0_8 = arith.constant 0 : index
    %8 = vector.load %arg5[%c0_6, %c0_7, %c0_8] : memref<1x128x256xf32, #tpu.memory_space<vmem>>, vector<1x128x256xf32>
    %9 = vector.shape_cast %8 : vector<1x128x256xf32> to vector<128x256xf32>
    %10 = vector.shape_cast %7 : vector<128x256xf32> to vector<1x128x256xf32>
    tpu.vector_store %arg5[%c0_6, %c0_7, %c0_8], %10 {strides = array<i32>} : memref<1x128x256xf32, #tpu.memory_space<vmem>>, vector<1x128x256xf32>,
    %11 = vector.extract_strided_slice %6 {offsets = [0, 256], sizes = [128, 256], strides = [1, 1]} : vector<128x768xf32> to vector<128x256xf32>
    %c0_9 = arith.constant 0 : index
    %c0_10 = arith.constant 0 : index
    %c0_11 = arith.constant 0 : index
    %12 = vector.load %arg6[%c0_9, %c0_10, %c0_11] : memref<1x128x256xf32, #tpu.memory_space<vmem>>, vector<1x128x256xf32>
    %13 = vector.shape_cast %12 : vector<1x128x256xf32> to vector<128x256xf32>
    %14 = vector.shape_cast %11 : vector<128x256xf32> to vector<1x128x256xf32>
    tpu.vector_store %arg6[%c0_9, %c0_10, %c0_11], %14 {strides = array<i32>} : memref<1x128x256xf32, #tpu.memory_space<vmem>>, vector<1x128x256xf32>,
    %15 = vector.extract_strided_slice %6 {offsets = [0, 512], sizes = [128, 256], strides = [1, 1]} : vector<128x768xf32> to vector<128x256xf32>
    %c0_12 = arith.constant 0 : index
    %c0_13 = arith.constant 0 : index
    %c0_14 = arith.constant 0 : index
    %16 = vector.load %arg7[%c0_12, %c0_13, %c0_14] : memref<1x128x256xf32, #tpu.memory_space<vmem>>, vector<1x128x256xf32>
    %17 = vector.shape_cast %16 : vector<1x128x256xf32> to vector<128x256xf32>
    %18 = vector.shape_cast %15 : vector<128x256xf32> to vector<1x128x256xf32>
    tpu.vector_store %arg7[%c0_12, %c0_13, %c0_14], %18 {strides = array<i32>} : memref<1x128x256xf32, #tpu.memory_space<vmem>>, vector<1x128x256xf32>,
    return
  }
  func.func @transform_0(%arg0: i32, %arg1: i32) -> (i32, i32, i32) {
    %c0_i32 = arith.constant 0 : i32
    %c0_i32_0 = arith.constant 0 : i32
    return %arg0, %arg1, %c0_i32 : i32, i32, i32
  }
  func.func @transform_1(%arg0: i32, %arg1: i32) -> (i32, i32) {
    %c0_i32 = arith.constant 0 : i32
    %c0_i32_0 = arith.constant 0 : i32
    %c0_i32_1 = arith.constant 0 : i32
    return %c0_i32, %c0_i32_0 : i32, i32
  }
  func.func @transform_2(%arg0: i32, %arg1: i32) -> (i32, i32) {
    %c0_i32 = arith.constant 0 : i32
    %c0_i32_0 = arith.constant 0 : i32
    %c0_i32_1 = arith.constant 0 : i32
    return %c0_i32, %c0_i32_0 : i32, i32
  }
  func.func @transform_3(%arg0: i32, %arg1: i32) -> (i32, i32, i32) {
    %c0_i32 = arith.constant 0 : i32
    %c0_i32_0 = arith.constant 0 : i32
    return %arg0, %arg1, %c0_i32 : i32, i32, i32
  }
  func.func @transform_4(%arg0: i32, %arg1: i32) -> (i32, i32, i32) {
    %c0_i32 = arith.constant 0 : i32
    %c0_i32_0 = arith.constant 0 : i32
    return %arg0, %arg1, %c0_i32 : i32, i32, i32
  }
  func.func @transform_5(%arg0: i32, %arg1: i32) -> (i32, i32, i32) {
    %c0_i32 = arith.constant 0 : i32
    %c0_i32_0 = arith.constant 0 : i32
    return %arg0, %arg1, %c0_i32 : i32, i32, i32
  }
}

</mosaic_0001>

<llo_original>
// kernel: tpu_custom_call.1
$region0: #{tpu_custom_call.1}
  #allocation0 [shape = 'u32[]', space=smem, size = 0x4, offset = 0x4, fixed_abs, tag = 'smem constant byte address 0x4 - core index']
  #allocation1 [shape = 'u32[144,128]{1,0:T(1,128)}', space=vmem, size = 0x12000, scoped, tag = 'internal scratch']
  %s0 = inlined_call_operand.hbm [shape: f32[2,128,256], index: 0, kind: input, shape index: {}]
  %s1 = inlined_call_operand.hbm [shape: f32[256,768], index: 1, kind: input, shape index: {}]
  %s2 = inlined_call_operand.hbm [shape: f32[1,768], index: 2, kind: input, shape index: {}]
  %s3 = inlined_call_operand.hbm [shape: f32[2,128,256], index: 3, kind: output, shape index: {0}]
  %s4 = inlined_call_operand.hbm [shape: f32[2,128,256], index: 4, kind: output, shape index: {1}]
  %s5 = inlined_call_operand.hbm [shape: f32[2,128,256], index: 5, kind: output, shape index: {2}]
  %6 = xla_tuple %s3, %s4, %s5
  %s7 = sld [smem:[#allocation0]]
  $region73: #{tpu_custom_call.1} parent=0
    _
  %s9 = ssub.s32 1, %s7
  %s10 = scalar_select 0, %s9, %s7
  $region1: #{tpu_custom_call.1} parent=0
    #allocation2 [shape = 'u8[262144]{0}', space=vmem, size = 0x40000, scoped, tag = 'input window, operand 0']
    #allocation3 [shape = 's32[2]{0}', space=sflag, size = 0x8, scoped, tag = 'scoped memory for tpu_custom_call.1']
    #allocation4 [shape = 's32[2]{0}', space=sflag, size = 0x8, scoped, tag = 'scoped memory for tpu_custom_call.1']
    #allocation5 [shape = 'u8[786432]{0}', space=vmem, size = 0xc0000, scoped, tag = 'input window, operand 1, single buffered']
    #allocation6 [shape = 's32[1]{0}', space=sflag, size = 0x4, scoped, tag = 'scoped memory for tpu_custom_call.1']
    #allocation7 [shape = 'u8[3072]{0}', space=vmem, size = 0xc00, scoped, tag = 'input window, operand 2, single buffered']
    #allocation8 [shape = 'u8[262144]{0}', space=vmem, size = 0x40000, scoped, tag = 'output window, operand 0']
    #allocation9 [shape = 'u8[262144]{0}', space=vmem, size = 0x40000, scoped, tag = 'output window, operand 1']
    #allocation10 [shape = 's32[2]{0}', space=sflag, size = 0x8, scoped, tag = 'scoped memory for tpu_custom_call.1']
    #allocation11 [shape = 'u8[262144]{0}', space=vmem, size = 0x40000, scoped, tag = 'output window, operand 2']
    %11 = vsyncpa [#allocation3], 0
    %s12 = scalar_lea.sflag [#allocation3], 1
    %13 = vsyncpa %s12, 0
    %14 = vsyncpa [#allocation6], 0
    %15 = vsyncpa [#allocation4], 0
    %s16 = scalar_lea.sflag [#allocation4], 1
    %17 = vsyncpa %s16, 0
    %18 = vsyncpa [#allocation10], 0
    %s19 = scalar_lea.sflag [#allocation10], 1
    %20 = vsyncpa %s19, 0
    loop: start=0, step=1, limit=4
    $region2: #{tpu_custom_call.1} parent=1 // loop_pre_header
      _
    $region3: #{tpu_custom_call.1} parent=1 // loop_header
      %s22 = sphi 0, %s26
      %p23 = scmp.ge.s32.totalorder %s22, 4
      %s29 = sphi 0, %s41
      %s30 = sphi 0, %s37
      %s31 = sphi 0, %s29
      %s32 = sphi 0, %s30
      %s33 = sphi 0, %s31
      %s34 = sphi 0, %s32
      %s46 = sphi 0, %s48
      %s49 = sphi 0, %s46
      %s50 = sphi 0, %s49
      %s66 = sphi 0, %s50
      %s70 = sphi 0, %s70
      %s72 = sphi 0, %s70
      %s73 = sphi 0, %s72
      %s87 = sphi 0, %s73
      %s91 = sphi 0, %s91
      %s93 = sphi 0, %s91
      %s94 = sphi 0, %s93
      %s108 = sphi 0, %s94
      %s116 = sphi 0, %s118
      %s119 = sphi 0, %s116
      %s120 = sphi 0, %s119
      %s136 = sphi 0, %s120
      %s144 = sphi 0, %s146
      %s147 = sphi 0, %s144
      %s148 = sphi 0, %s147
      %s164 = sphi 0, %s148
      %s172 = sphi 0, %s174
      %s175 = sphi 0, %s172
      %s176 = sphi 0, %s175
      %s192 = sphi 0, %s176
    $region4: #{tpu_custom_call.1} parent=1 // loop_header_branch
      %25 = sbr.rel (%p23) target = $region8
    $region5: #{tpu_custom_call.1} parent=1 // loop_body
      %s27 = ssub.s32 %s22, 1
      %s28 = ssub.s32 %s22, 2
      %s35 = sadd.s32 1, %s30
      %p36 = scmp.ge.s32.totalorder %s35, 1
      %s37 = scalar_select %p36, 0, %s35
      %s38 = sadd.s32 1, %s29
      %s39 = scalar_select %p36, %s38, %s29
      %p40 = scmp.ge.s32.totalorder %s39, 2
      %s41 = scalar_select %p40, 0, %s39
      %s42 = ssub.s32 %s29, %s41
      %s43 = ssub.s32 %s30, %s37
      %s44 = sor.u32 %s42, %s43
      %p45 = scmp.eq.s32.totalorder %s44, 0
      %s47 = sadd.s32 %s46, 1
      %s48 = scalar_select %p45, %s46, %s47
      %p51 = pneg %p45
      %p52 = scmp.eq.s32.totalorder %s22, 1
      %p53 = por %p51, %p52
      %p54 = scmp.ne.s32.totalorder %s46, %s49
      %p55 = scmp.eq.s32.totalorder %s22, 0
      %p56 = por %p54, %p55
      %p57 = scmp.ne.s32.totalorder %s46, %s49
      %p58 = scmp.eq.s32.totalorder %s27, 1
      %p59 = por %p57, %p58
      %p60 = scmp.ne.s32.totalorder %s49, %s50
      %p61 = scmp.eq.s32.totalorder %s27, 0
      %p62 = por %p60, %p61
      %p63 = scmp.ne.s32.totalorder %s49, %s50
      %p64 = scmp.eq.s32.totalorder %s28, 1
      %p65 = por %p63, %p64
      %p67 = scmp.ne.s32.totalorder %s50, %s66
      %p68 = scmp.eq.s32.totalorder %s28, 0
      %p69 = por %p67, %p68
      %s71 = sadd.s32 %s70, 1
      %p74 = scmp.eq.s32.totalorder %s22, 1
      %p75 = scmp.ne.s32.totalorder %s70, %s72
      %p76 = scmp.eq.s32.totalorder %s22, 0
      %p77 = por %p75, %p76
      %p78 = scmp.ne.s32.totalorder %s70, %s72
      %p79 = scmp.eq.s32.totalorder %s27, 1
      %p80 = por %p78, %p79
      %p81 = scmp.ne.s32.totalorder %s72, %s73
      %p82 = scmp.eq.s32.totalorder %s27, 0
      %p83 = por %p81, %p82
      %p84 = scmp.ne.s32.totalorder %s72, %s73
      %p85 = scmp.eq.s32.totalorder %s28, 1
      %p86 = por %p84, %p85
      %p88 = scmp.ne.s32.totalorder %s73, %s87
      %p89 = scmp.eq.s32.totalorder %s28, 0
      %p90 = por %p88, %p89
      %s92 = sadd.s32 %s91, 1
      %p95 = scmp.eq.s32.totalorder %s22, 1
      %p96 = scmp.ne.s32.totalorder %s91, %s93
      %p97 = scmp.eq.s32.totalorder %s22, 0
      %p98 = por %p96, %p97
      %p99 = scmp.ne.s32.totalorder %s91, %s93
      %p100 = scmp.eq.s32.totalorder %s27, 1
      %p101 = por %p99, %p100
      %p102 = scmp.ne.s32.totalorder %s93, %s94
      %p103 = scmp.eq.s32.totalorder %s27, 0
      %p104 = por %p102, %p103
      %p105 = scmp.ne.s32.totalorder %s93, %s94
      %p106 = scmp.eq.s32.totalorder %s28, 1
      %p107 = por %p105, %p106
      %p109 = scmp.ne.s32.totalorder %s94, %s108
      %p110 = scmp.eq.s32.totalorder %s28, 0
      %p111 = por %p109, %p110
      %s112 = ssub.s32 %s29, %s41
      %s113 = ssub.s32 %s30, %s37
      %s114 = sor.u32 %s112, %s113
      %p115 = scmp.eq.s32.totalorder %s114, 0
      %s117 = sadd.s32 %s116, 1
      %s118 = scalar_select %p115, %s116, %s117
      %p121 = pneg %p115
      %p122 = scmp.eq.s32.totalorder %s22, 1
      %p123 = por %p121, %p122
      %p124 = scmp.ne.s32.totalorder %s116, %s119
      %p125 = scmp.eq.s32.totalorder %s22, 0
      %p126 = por %p124, %p125
      %p127 = scmp.ne.s32.totalorder %s116, %s119
      %p128 = scmp.eq.s32.totalorder %s27, 1
      %p129 = por %p127, %p128
      %p130 = scmp.ne.s32.totalorder %s119, %s120
      %p131 = scmp.eq.s32.totalorder %s27, 0
      %p132 = por %p130, %p131
      %p133 = scmp.ne.s32.totalorder %s119, %s120
      %p134 = scmp.eq.s32.totalorder %s28, 1
      %p135 = por %p133, %p134
      %p137 = scmp.ne.s32.totalorder %s120, %s136
      %p138 = scmp.eq.s32.totalorder %s28, 0
      %p139 = por %p137, %p138
      %s140 = ssub.s32 %s29, %s41
      %s141 = ssub.s32 %s30, %s37
      %s142 = sor.u32 %s140, %s141
      %p143 = scmp.eq.s32.totalorder %s142, 0
      %s145 = sadd.s32 %s144, 1
      %s146 = scalar_select %p143, %s144, %s145
      %p149 = pneg %p143
      %p150 = scmp.eq.s32.totalorder %s22, 1
      %p151 = por %p149, %p150
      %p152 = scmp.ne.s32.totalorder %s144, %s147
      %p153 = scmp.eq.s32.totalorder %s22, 0
      %p154 = por %p152, %p153
      %p155 = scmp.ne.s32.totalorder %s144, %s147
      %p156 = scmp.eq.s32.totalorder %s27, 1
      %p157 = por %p155, %p156
      %p158 = scmp.ne.s32.totalorder %s147, %s148
      %p159 = scmp.eq.s32.totalorder %s27, 0
      %p160 = por %p158, %p159
      %p161 = scmp.ne.s32.totalorder %s147, %s148
      %p162 = scmp.eq.s32.totalorder %s28, 1
      %p163 = por %p161, %p162
      %p165 = scmp.ne.s32.totalorder %s148, %s164
      %p166 = scmp.eq.s32.totalorder %s28, 0
      %p167 = por %p165, %p166
      %s168 = ssub.s32 %s29, %s41
      %s169 = ssub.s32 %s30, %s37
      %s170 = sor.u32 %s168, %s169
      %p171 = scmp.eq.s32.totalorder %s170, 0
      %s173 = sadd.s32 %s172, 1
      %s174 = scalar_select %p171, %s172, %s173
      %p177 = pneg %p171
      %p178 = scmp.eq.s32.totalorder %s22, 1
      %p179 = por %p177, %p178
      %p180 = scmp.ne.s32.totalorder %s172, %s175
      %p181 = scmp.eq.s32.totalorder %s22, 0
      %p182 = por %p180, %p181
      %p183 = scmp.ne.s32.totalorder %s172, %s175
      %p184 = scmp.eq.s32.totalorder %s27, 1
      %p185 = por %p183, %p184
      %p186 = scmp.ne.s32.totalorder %s175, %s176
      %p187 = scmp.eq.s32.totalorder %s27, 0
      %p188 = por %p186, %p187
      %p189 = scmp.ne.s32.totalorder %s175, %s176
      %p190 = scmp.eq.s32.totalorder %s28, 1
      %p191 = por %p189, %p190
      %p193 = scmp.ne.s32.totalorder %s176, %s192
      %p194 = scmp.eq.s32.totalorder %s28, 0
      %p195 = por %p193, %p194
      %p196 = scmp.le.s32.totalorder 1, %s22
      %p197 = scmp.lt.s32.totalorder %s22, 3
      %p198 = pnand %p196, %p197
      %p199 = pneg %p198
      // Predicated region
      $region9: #{tpu_custom_call.1} parent=5 // pred_check
        _
      $region10: #{tpu_custom_call.1} parent=5 // pred_check_branch
        %201 = sbr.rel (%p198) target = $region12
      $region11: #{tpu_custom_call.1} parent=5 // pred_region
        %s202 = ssub.s32 %s22, 1
        // Predicated region
        $region13: #{tpu_custom_call.1} parent=11 // pred_check
          %p203 = pneg %p83
        $region14: #{tpu_custom_call.1} parent=11 // pred_check_branch
          %205 = sbr.rel (%p203) target = $region16
        $region15: #{tpu_custom_call.1} parent=11 // pred_region
          %s207 = ssub.s32 24576, 24576
          %208 = vsyncadd [#allocation6], %s207
          %s209 = sshll.u32 [#allocation5], 4
          %s210 = int_to_ptr.vmem [resolvable:$true] %s209
          %215 = dma.hbm_to_vmem [thread:$0]  %s1, 24576, %s210, [#allocation6], 768, 768, 48
        $region16: #{tpu_custom_call.1} parent=11 // pred_fallthru
          _
        // Predicated region
        $region17: #{tpu_custom_call.1} parent=11 // pred_check
          %p216 = pneg %p104
        $region18: #{tpu_custom_call.1} parent=11 // pred_check_branch
          %218 = sbr.rel (%p216) target = $region20
        $region19: #{tpu_custom_call.1} parent=11 // pred_region
          %s220 = ssub.s32 96, 96
          %221 = vsyncadd [#allocation6], %s220
          %s223 = sshll.u32 [#allocation7], 4
          %s224 = int_to_ptr.vmem [resolvable:$true] %s223
          %226 = dma.hbm_to_vmem [thread:$0]  %s2, 96, %s224, [#allocation6]
        $region20: #{tpu_custom_call.1} parent=11 // pred_fallthru
          _
      $region12: #{tpu_custom_call.1} parent=5 // pred_fallthru
        _
      %p227 = scmp.lt.s32.totalorder %s22, 2
      // Predicated region
      $region21: #{tpu_custom_call.1} parent=5 // pred_check
        %p228 = pneg %p227
      $region22: #{tpu_custom_call.1} parent=5 // pred_check_branch
        %230 = sbr.rel (%p228) target = $region24
      $region23: #{tpu_custom_call.1} parent=5 // pred_region
        // Predicated region
        $region25: #{tpu_custom_call.1} parent=23 // pred_check
          %p231 = pneg %p56
        $region26: #{tpu_custom_call.1} parent=23 // pred_check_branch
          %233 = sbr.rel (%p231) target = $region28
        $region27: #{tpu_custom_call.1} parent=23 // pred_region
          %s234 = sand.u32 %s46, 1
          %s235 = scalar_lea.sflag [#allocation3], %s234
          %s236 = sand.u32 %s46, 1
          %s237 = smul.addr %s236, 256
          %s238 = scalar_lea.vmem [#allocation2], %s237
          %s239 = smul.u32 16, %s30
          %s241 = ssub.s32 4096, 4096
          %242 = vsyncadd %s235, %s241
          %s243 = smul.addr %s239, 2
          %s244 = smul.addr %s29, 32
          %s245 = sadd.s32 %s243, %s244
          %s246 = smul.addr %s245, 128
          %s247 = scalar_lea.hbm %s0, %s246
          %s248 = sshll.u32 %s238, 4
          %s249 = int_to_ptr.vmem [resolvable:$true] %s248
          %254 = dma.hbm_to_vmem [thread:$0]  %s247, 4096, %s249, %s235, 256, 256, 16
        $region28: #{tpu_custom_call.1} parent=23 // pred_fallthru
          _
      $region24: #{tpu_custom_call.1} parent=5 // pred_fallthru
        _
      %p255 = scmp.le.s32.totalorder 1, %s22
      %p256 = scmp.lt.s32.totalorder %s22, 3
      %p257 = pnand %p255, %p256
      %p258 = pneg %p257
      // Predicated region
      $region29: #{tpu_custom_call.1} parent=5 // pred_check
        _
      $region30: #{tpu_custom_call.1} parent=5 // pred_check_branch
        %260 = sbr.rel (%p257) target = $region32
      $region31: #{tpu_custom_call.1} parent=5 // pred_region
        %s261 = ssub.s32 %s22, 1
        %s262 = sand.u32 %s49, 1
        %s263 = scalar_lea.sflag [#allocation3], %s262
        %s264 = sand.u32 %s49, 1
        %s265 = smul.addr %s264, 256
        %s266 = scalar_lea.vmem [#allocation2], %s265
        // Predicated region
        $region33: #{tpu_custom_call.1} parent=31 // pred_check
          %p267 = pneg %p62
        $region34: #{tpu_custom_call.1} parent=31 // pred_check_branch
          %269 = sbr.rel (%p267) target = $region36
        $region35: #{tpu_custom_call.1} parent=31 // pred_region
          %270 = dma.done %s263, 4096
        $region36: #{tpu_custom_call.1} parent=31 // pred_fallthru
          _
        // Predicated region
        $region37: #{tpu_custom_call.1} parent=31 // pred_check
          %p271 = pneg %p83
        $region38: #{tpu_custom_call.1} parent=31 // pred_check_branch
          %273 = sbr.rel (%p271) target = $region40
        $region39: #{tpu_custom_call.1} parent=31 // pred_region
          %274 = dma.done [#allocation6], 24576
        $region40: #{tpu_custom_call.1} parent=31 // pred_fallthru
          _
        // Predicated region
        $region41: #{tpu_custom_call.1} parent=31 // pred_check
          %p275 = pneg %p104
        $region42: #{tpu_custom_call.1} parent=31 // pred_check_branch
          %277 = sbr.rel (%p275) target = $region44
        $region43: #{tpu_custom_call.1} parent=31 // pred_region
          %278 = dma.done [#allocation6], 96
        $region44: #{tpu_custom_call.1} parent=31 // pred_fallthru
          _
        %s279 = sand.u32 %s49, 1
        %s280 = scalar_lea.sflag [#allocation3], %s279
        %s281 = sand.u32 %s49, 1
        %s282 = smul.addr %s281, 256
        %s283 = scalar_lea.vmem [#allocation2], %s282
        %p284 = pneg %p62
        %p285 = pneg %p59
        %p286 = pneg %p83
        %p287 = pneg %p80
        %p288 = pneg %p104
        %p289 = pneg %p101
        %p290 = pneg %p132
        %p291 = pneg %p129
        %s292 = sand.u32 %s119, 1
        %s293 = scalar_lea.sflag [#allocation4], %s292
        %s294 = sand.u32 %s119, 1
        %s295 = smul.addr %s294, 256
        %s296 = scalar_lea.vmem [#allocation8], %s295
        %p297 = pneg %p160
        %p298 = pneg %p157
        %s299 = sand.u32 %s27, 1
        %s300 = scalar_lea.sflag [#allocation10], %s299
        %s301 = sand.u32 %s147, 1
        %s302 = smul.addr %s301, 256
        %s303 = scalar_lea.vmem [#allocation9], %s302
        %p304 = pneg %p188
        %p305 = pneg %p185
        %s306 = sand.u32 %s27, 1
        %s307 = scalar_lea.sflag [#allocation10], %s306
        %s308 = sand.u32 %s175, 1
        %s309 = smul.addr %s308, 256
        %s310 = scalar_lea.vmem [#allocation11], %s309
        %s311 = smul.u32 16, %s32
        %s312 = smul.u32 16, %s32
        %s313 = smul.u32 16, %s32
        %s314 = smul.u32 16, %s32
        %v315 = vld [vmem:[%s266] sm:$0xff]
        %v316 = vld [vmem:[%s266 + $0x8] sm:$0xff]
        %v317 = vld [vmem:[%s266 + $0x10] sm:$0xff]
        %v318 = vld [vmem:[%s266 + $0x18] sm:$0xff]
        %v319 = vld [vmem:[%s266 + $0x20] sm:$0xff]
        %v320 = vld [vmem:[%s266 + $0x28] sm:$0xff]
        %v321 = vld [vmem:[%s266 + $0x30] sm:$0xff]
        %v322 = vld [vmem:[%s266 + $0x38] sm:$0xff]
        %v323 = vld [vmem:[%s266 + $0x40] sm:$0xff]
        %v324 = vld [vmem:[%s266 + $0x48] sm:$0xff]
        %v325 = vld [vmem:[%s266 + $0x50] sm:$0xff]
        %v326 = vld [vmem:[%s266 + $0x58] sm:$0xff]
        %v327 = vld [vmem:[%s266 + $0x60] sm:$0xff]
        %v328 = vld [vmem:[%s266 + $0x68] sm:$0xff]
        %v329 = vld [vmem:[%s266 + $0x70] sm:$0xff]
        %v330 = vld [vmem:[%s266 + $0x78] sm:$0xff]
        %v331 = vld [vmem:[%s266 + $0x80] sm:$0xff]
        %v332 = vld [vmem:[%s266 + $0x88] sm:$0xff]
        %v333 = vld [vmem:[%s266 + $0x90] sm:$0xff]
        %v334 = vld [vmem:[%s266 + $0x98] sm:$0xff]
        %v335 = vld [vmem:[%s266 + $0xa0] sm:$0xff]
        %v336 = vld [vmem:[%s266 + $0xa8] sm:$0xff]
        %v337 = vld [vmem:[%s266 + $0xb0] sm:$0xff]
        %v338 = vld [vmem:[%s266 + $0xb8] sm:$0xff]
        %v339 = vld [vmem:[%s266 + $0xc0] sm:$0xff]
        %v340 = vld [vmem:[%s266 + $0xc8] sm:$0xff]
        %v341 = vld [vmem:[%s266 + $0xd0] sm:$0xff]
        %v342 = vld [vmem:[%s266 + $0xd8] sm:$0xff]
        %v343 = vld [vmem:[%s266 + $0xe0] sm:$0xff]
        %v344 = vld [vmem:[%s266 + $0xe8] sm:$0xff]
        %v345 = vld [vmem:[%s266 + $0xf0] sm:$0xff]
        %v346 = vld [vmem:[%s266 + $0xf8] sm:$0xff]
        %v347 = vld [vmem:[#allocation5] sm:$0xff]
        %v348 = vld [vmem:[#allocation5 + $0x8] sm:$0xff]
        %v349 = vld [vmem:[#allocation5 + $0x10] sm:$0xff]
        %v350 = vld [vmem:[#allocation5 + $0x18] sm:$0xff]
        %v351 = vld [vmem:[#allocation5 + $0x20] sm:$0xff]
        %v352 = vld [vmem:[#allocation5 + $0x28] sm:$0xff]
        %v353 = vld [vmem:[#allocation5 + $0x30] sm:$0xff]
        %v354 = vld [vmem:[#allocation5 + $0x38] sm:$0xff]
        %v355 = vld [vmem:[#allocation5 + $0x40] sm:$0xff]
        %v356 = vld [vmem:[#allocation5 + $0x48] sm:$0xff]
        %v357 = vld [vmem:[#allocation5 + $0x50] sm:$0xff]
        %v358 = vld [vmem:[#allocation5 + $0x58] sm:$0xff]
        %v359 = vld [vmem:[#allocation5 + $0x60] sm:$0xff]
        %v360 = vld [vmem:[#allocation5 + $0x68] sm:$0xff]
        %v361 = vld [vmem:[#allocation5 + $0x70] sm:$0xff]
        %v362 = vld [vmem:[#allocation5 + $0x78] sm:$0xff]
        %v363 = vld [vmem:[#allocation5 + $0x80] sm:$0xff]
        %v364 = vld [vmem:[#allocation5 + $0x88] sm:$0xff]
        %v365 = vld [vmem:[#allocation5 + $0x90] sm:$0xff]
        %v366 = vld [vmem:[#allocation5 + $0x98] sm:$0xff]
        %v367 = vld [vmem:[#allocation5 + $0xa0] sm:$0xff]
        %v368 = vld [vmem:[#allocation5 + $0xa8] sm:$0xff]
        %v369 = vld [vmem:[#allocation5 + $0xb0] sm:$0xff]
        %v370 = vld [vmem:[#allocation5 + $0xb8] sm:$0xff]
        %v371 = vld [vmem:[#allocation5 + $0xc0] sm:$0xff]
        %v372 = vld [vmem:[#allocation5 + $0xc8] sm:$0xff]
        %v373 = vld [vmem:[#allocation5 + $0xd0] sm:$0xff]
        %v374 = vld [vmem:[#allocation5 + $0xd8] sm:$0xff]
        %v375 = vld [vmem:[#allocation5 + $0xe0] sm:$0xff]
        %v376 = vld [vmem:[#allocation5 + $0xe8] sm:$0xff]
        %v377 = vld [vmem:[#allocation5 + $0xf0] sm:$0xff]
        %v378 = vld [vmem:[#allocation5 + $0xf8] sm:$0xff]
        %v379 = vld [vmem:[#allocation5 + $0x100] sm:$0xff]
        %v380 = vld [vmem:[#allocation5 + $0x108] sm:$0xff]
        %v381 = vld [vmem:[#allocation5 + $0x110] sm:$0xff]
        %v382 = vld [vmem:[#allocation5 + $0x118] sm:$0xff]
        %v383 = vld [vmem:[#allocation5 + $0x120] sm:$0xff]
        %v384 = vld [vmem:[#allocation5 + $0x128] sm:$0xff]
        %v385 = vld [vmem:[#allocation5 + $0x130] sm:$0xff]
        %v386 = vld [vmem:[#allocation5 + $0x138] sm:$0xff]
        %v387 = vld [vmem:[#allocation5 + $0x140] sm:$0xff]
        %v388 = vld [vmem:[#allocation5 + $0x148] sm:$0xff]
        %v389 = vld [vmem:[#allocation5 + $0x150] sm:$0xff]
        %v390 = vld [vmem:[#allocation5 + $0x158] sm:$0xff]
        %v391 = vld [vmem:[#allocation5 + $0x160] sm:$0xff]
        %v392 = vld [vmem:[#allocation5 + $0x168] sm:$0xff]
        %v393 = vld [vmem:[#allocation5 + $0x170] sm:$0xff]
        %v394 = vld [vmem:[#allocation5 + $0x178] sm:$0xff]
        %v395 = vld [vmem:[#allocation5 + $0x180] sm:$0xff]
        %v396 = vld [vmem:[#allocation5 + $0x188] sm:$0xff]
        %v397 = vld [vmem:[#allocation5 + $0x190] sm:$0xff]
        %v398 = vld [vmem:[#allocation5 + $0x198] sm:$0xff]
        %v399 = vld [vmem:[#allocation5 + $0x1a0] sm:$0xff]
        %v400 = vld [vmem:[#allocation5 + $0x1a8] sm:$0xff]
        %v401 = vld [vmem:[#allocation5 + $0x1b0] sm:$0xff]
        %v402 = vld [vmem:[#allocation5 + $0x1b8] sm:$0xff]
        %v403 = vld [vmem:[#allocation5 + $0x1c0] sm:$0xff]
        %v404 = vld [vmem:[#allocation5 + $0x1c8] sm:$0xff]
        %v405 = vld [vmem:[#allocation5 + $0x1d0] sm:$0xff]
        %v406 = vld [vmem:[#allocation5 + $0x1d8] sm:$0xff]
        %v407 = vld [vmem:[#allocation5 + $0x1e0] sm:$0xff]
        %v408 = vld [vmem:[#allocation5 + $0x1e8] sm:$0xff]
        %v409 = vld [vmem:[#allocation5 + $0x1f0] sm:$0xff]
        %v410 = vld [vmem:[#allocation5 + $0x1f8] sm:$0xff]
        %v411 = vld [vmem:[#allocation5 + $0x200] sm:$0xff]
        %v412 = vld [vmem:[#allocation5 + $0x208] sm:$0xff]
        %v413 = vld [vmem:[#allocation5 + $0x210] sm:$0xff]
        %v414 = vld [vmem:[#allocation5 + $0x218] sm:$0xff]
        %v415 = vld [vmem:[#allocation5 + $0x220] sm:$0xff]
        %v416 = vld [vmem:[#allocation5 + $0x228] sm:$0xff]
        %v417 = vld [vmem:[#allocation5 + $0x230] sm:$0xff]
        %v418 = vld [vmem:[#allocation5 + $0x238] sm:$0xff]
        %v419 = vld [vmem:[#allocation5 + $0x240] sm:$0xff]
        %v420 = vld [vmem:[#allocation5 + $0x248] sm:$0xff]
        %v421 = vld [vmem:[#allocation5 + $0x250] sm:$0xff]
        %v422 = vld [vmem:[#allocation5 + $0x258] sm:$0xff]
        %v423 = vld [vmem:[#allocation5 + $0x260] sm:$0xff]
        %v424 = vld [vmem:[#allocation5 + $0x268] sm:$0xff]
        %v425 = vld [vmem:[#allocation5 + $0x270] sm:$0xff]
        %v426 = vld [vmem:[#allocation5 + $0x278] sm:$0xff]
        %v427 = vld [vmem:[#allocation5 + $0x280] sm:$0xff]
        %v428 = vld [vmem:[#allocation5 + $0x288] sm:$0xff]
        %v429 = vld [vmem:[#allocation5 + $0x290] sm:$0xff]
        %v430 = vld [vmem:[#allocation5 + $0x298] sm:$0xff]
        %v431 = vld [vmem:[#allocation5 + $0x2a0] sm:$0xff]
        %v432 = vld [vmem:[#allocation5 + $0x2a8] sm:$0xff]
        %v433 = vld [vmem:[#allocation5 + $0x2b0] sm:$0xff]
        %v434 = vld [vmem:[#allocation5 + $0x2b8] sm:$0xff]
        %v435 = vld [vmem:[#allocation5 + $0x2c0] sm:$0xff]
        %v436 = vld [vmem:[#allocation5 + $0x2c8] sm:$0xff]
        %v437 = vld [vmem:[#allocation5 + $0x2d0] sm:$0xff]
        %v438 = vld [vmem:[#allocation5 + $0x2d8] sm:$0xff]
        %v439 = vld [vmem:[#allocation5 + $0x2e0] sm:$0xff]
        %v440 = vld [vmem:[#allocation5 + $0x2e8] sm:$0xff]
        %v441 = vld [vmem:[#allocation5 + $0x2f0] sm:$0xff]
        %v442 = vld [vmem:[#allocation5 + $0x2f8] sm:$0xff]
        %v443 = vld [vmem:[#allocation5 + $0x300] sm:$0xff]
        %v444 = vld [vmem:[#allocation5 + $0x308] sm:$0xff]
        %v445 = vld [vmem:[#allocation5 + $0x310] sm:$0xff]
        %v446 = vld [vmem:[#allocation5 + $0x318] sm:$0xff]
        %v447 = vld [vmem:[#allocation5 + $0x320] sm:$0xff]
        %v448 = vld [vmem:[#allocation5 + $0x328] sm:$0xff]
        %v449 = vld [vmem:[#allocation5 + $0x330] sm:$0xff]
        %v450 = vld [vmem:[#allocation5 + $0x338] sm:$0xff]
        %v451 = vld [vmem:[#allocation5 + $0x340] sm:$0xff]
        %v452 = vld [vmem:[#allocation5 + $0x348] sm:$0xff]
        %v453 = vld [vmem:[#allocation5 + $0x350] sm:$0xff]
        %v454 = vld [vmem:[#allocation5 + $0x358] sm:$0xff]
        %v455 = vld [vmem:[#allocation5 + $0x360] sm:$0xff]
        %v456 = vld [vmem:[#allocation5 + $0x368] sm:$0xff]
        %v457 = vld [vmem:[#allocation5 + $0x370] sm:$0xff]
        %v458 = vld [vmem:[#allocation5 + $0x378] sm:$0xff]
        %v459 = vld [vmem:[#allocation5 + $0x380] sm:$0xff]
        %v460 = vld [vmem:[#allocation5 + $0x388] sm:$0xff]
        %v461 = vld [vmem:[#allocation5 + $0x390] sm:$0xff]
        %v462 = vld [vmem:[#allocation5 + $0x398] sm:$0xff]
        %v463 = vld [vmem:[#allocation5 + $0x3a0] sm:$0xff]
        %v464 = vld [vmem:[#allocation5 + $0x3a8] sm:$0xff]
        %v465 = vld [vmem:[#allocation5 + $0x3b0] sm:$0xff]
        %v466 = vld [vmem:[#allocation5 + $0x3b8] sm:$0xff]
        %v467 = vld [vmem:[#allocation5 + $0x3c0] sm:$0xff]
        %v468 = vld [vmem:[#allocation5 + $0x3c8] sm:$0xff]
        %v469 = vld [vmem:[#allocation5 + $0x3d0] sm:$0xff]
        %v470 = vld [vmem:[#allocation5 + $0x3d8] sm:$0xff]
        %v471 = vld [vmem:[#allocation5 + $0x3e0] sm:$0xff]
        %v472 = vld [vmem:[#allocation5 + $0x3e8] sm:$0xff]
        %v473 = vld [vmem:[#allocation5 + $0x3f0] sm:$0xff]
        %v474 = vld [vmem:[#allocation5 + $0x3f8] sm:$0xff]
        %v475 = vld [vmem:[#allocation5 + $0x400] sm:$0xff]
        %v476 = vld [vmem:[#allocation5 + $0x408] sm:$0xff]
        %v477 = vld [vmem:[#allocation5 + $0x410] sm:$0xff]
        %v478 = vld [vmem:[#allocation5 + $0x418] sm:$0xff]
        %v479 = vld [vmem:[#allocation5 + $0x420] sm:$0xff]
        %v480 = vld [vmem:[#allocation5 + $0x428] sm:$0xff]
        %v481 = vld [vmem:[#allocation5 + $0x430] sm:$0xff]
        %v482 = vld [vmem:[#allocation5 + $0x438] sm:$0xff]
        %v483 = vld [vmem:[#allocation5 + $0x440] sm:$0xff]
        %v484 = vld [vmem:[#allocation5 + $0x448] sm:$0xff]
        %v485 = vld [vmem:[#allocation5 + $0x450] sm:$0xff]
        %v486 = vld [vmem:[#allocation5 + $0x458] sm:$0xff]
        %v487 = vld [vmem:[#allocation5 + $0x460] sm:$0xff]
        %v488 = vld [vmem:[#allocation5 + $0x468] sm:$0xff]
        %v489 = vld [vmem:[#allocation5 + $0x470] sm:$0xff]
        %v490 = vld [vmem:[#allocation5 + $0x478] sm:$0xff]
        %v491 = vld [vmem:[#allocation5 + $0x480] sm:$0xff]
        %v492 = vld [vmem:[#allocation5 + $0x488] sm:$0xff]
        %v493 = vld [vmem:[#allocation5 + $0x490] sm:$0xff]
        %v494 = vld [vmem:[#allocation5 + $0x498] sm:$0xff]
        %v495 = vld [vmem:[#allocation5 + $0x4a0] sm:$0xff]
        %v496 = vld [vmem:[#allocation5 + $0x4a8] sm:$0xff]
        %v497 = vld [vmem:[#allocation5 + $0x4b0] sm:$0xff]
        %v498 = vld [vmem:[#allocation5 + $0x4b8] sm:$0xff]
        %v499 = vld [vmem:[#allocation5 + $0x4c0] sm:$0xff]
        %v500 = vld [vmem:[#allocation5 + $0x4c8] sm:$0xff]
        %v501 = vld [vmem:[#allocation5 + $0x4d0] sm:$0xff]
        %v502 = vld [vmem:[#allocation5 + $0x4d8] sm:$0xff]
        %v503 = vld [vmem:[#allocation5 + $0x4e0] sm:$0xff]
        %v504 = vld [vmem:[#allocation5 + $0x4e8] sm:$0xff]
        %v505 = vld [vmem:[#allocation5 + $0x4f0] sm:$0xff]
        %v506 = vld [vmem:[#allocation5 + $0x4f8] sm:$0xff]
        %v507 = vld [vmem:[#allocation5 + $0x500] sm:$0xff]
        %v508 = vld [vmem:[#allocation5 + $0x508] sm:$0xff]
        %v509 = vld [vmem:[#allocation5 + $0x510] sm:$0xff]
        %v510 = vld [vmem:[#allocation5 + $0x518] sm:$0xff]
        %v511 = vld [vmem:[#allocation5 + $0x520] sm:$0xff]
        %v512 = vld [vmem:[#allocation5 + $0x528] sm:$0xff]
        %v513 = vld [vmem:[#allocation5 + $0x530] sm:$0xff]
        %v514 = vld [vmem:[#allocation5 + $0x538] sm:$0xff]
        %v515 = vld [vmem:[#allocation5 + $0x540] sm:$0xff]
        %v516 = vld [vmem:[#allocation5 + $0x548] sm:$0xff]
        %v517 = vld [vmem:[#allocation5 + $0x550] sm:$0xff]
        %v518 = vld [vmem:[#allocation5 + $0x558] sm:$0xff]
        %v519 = vld [vmem:[#allocation5 + $0x560] sm:$0xff]
        %v520 = vld [vmem:[#allocation5 + $0x568] sm:$0xff]
        %v521 = vld [vmem:[#allocation5 + $0x570] sm:$0xff]
        %v522 = vld [vmem:[#allocation5 + $0x578] sm:$0xff]
        %v523 = vld [vmem:[#allocation5 + $0x580] sm:$0xff]
        %v524 = vld [vmem:[#allocation5 + $0x588] sm:$0xff]
        %v525 = vld [vmem:[#allocation5 + $0x590] sm:$0xff]
        %v526 = vld [vmem:[#allocation5 + $0x598] sm:$0xff]
        %v527 = vld [vmem:[#allocation5 + $0x5a0] sm:$0xff]
        %v528 = vld [vmem:[#allocation5 + $0x5a8] sm:$0xff]
        %v529 = vld [vmem:[#allocation5 + $0x5b0] sm:$0xff]
        %v530 = vld [vmem:[#allocation5 + $0x5b8] sm:$0xff]
        %v531 = vld [vmem:[#allocation5 + $0x5c0] sm:$0xff]
        %v532 = vld [vmem:[#allocation5 + $0x5c8] sm:$0xff]
        %v533 = vld [vmem:[#allocation5 + $0x5d0] sm:$0xff]
        %v534 = vld [vmem:[#allocation5 + $0x5d8] sm:$0xff]
        %v535 = vld [vmem:[#allocation5 + $0x5e0] sm:$0xff]
        %v536 = vld [vmem:[#allocation5 + $0x5e8] sm:$0xff]
        %v537 = vld [vmem:[#allocation5 + $0x5f0] sm:$0xff]
        %v538 = vld [vmem:[#allocation5 + $0x5f8] sm:$0xff]
        %v539 = vld [vmem:[#allocation7] sm:$0x3f]
        %v541 = vlaneseq
        %v542 = vshrl.u32 %v541, 7
        %v543 = vsub.s32 0, %v542
        %v544 = vrot.slane %v539, %v543
        %v545 = vlaneseq
        %v546 = vshrl.u32 %v545, 7
        %v547 = vsub.s32 1, %v546
        %v548 = vrot.slane %v539, %v547
        %v549 = vlaneseq
        %v550 = vshrl.u32 %v549, 7
        %v551 = vsub.s32 2, %v550
        %v552 = vrot.slane %v539, %v551
        %v553 = vlaneseq
        %v554 = vshrl.u32 %v553, 7
        %v555 = vsub.s32 3, %v554
        %v556 = vrot.slane %v539, %v555
        %v557 = vlaneseq
        %v558 = vshrl.u32 %v557, 7
        %v559 = vsub.s32 4, %v558
        %v560 = vrot.slane %v539, %v559
        %v561 = vlaneseq
        %v562 = vshrl.u32 %v561, 7
        %v563 = vsub.s32 5, %v562
        %v564 = vrot.slane %v539, %v563
        %571 = vmatprep.subr.mxu0 %v438
        %572 = vmatpush1.msra.mxu0 %v437
        %573 = vmatprep.subr.mxu0 %v432
        %574 = vmatpush1.msra.mxu0 %v431
        %575 = vmatprep.subr.mxu0 %v426
        %576 = vmatpush1.msra.mxu0 %v425
        %577 = vmatprep.subr.mxu0 %v420
        %578 = vmatpush1.msra.mxu0 %v419
        %579 = vmatprep.subr.mxu0 %v414
        %580 = vmatpush1.msra.mxu0 %v413
        %581 = vmatprep.subr.mxu0 %v408
        %582 = vmatpush1.msra.mxu0 %v407
        %583 = vmatprep.subr.mxu0 %v402
        %584 = vmatpush1.msra.mxu0 %v401
        %585 = vmatprep.subr.mxu0 %v396
        %586 = vmatpush1.msra.mxu0 %v395
        %587 = vmatprep.subr.mxu0 %v390
        %588 = vmatpush1.msra.mxu0 %v389
        %589 = vmatprep.subr.mxu0 %v384
        %590 = vmatpush1.msra.mxu0 %v383
        %591 = vmatprep.subr.mxu0 %v378
        %592 = vmatpush1.msra.mxu0 %v377
        %593 = vmatprep.subr.mxu0 %v372
        %594 = vmatpush1.msra.mxu0 %v371
        %595 = vmatprep.subr.mxu0 %v366
        %596 = vmatpush1.msra.mxu0 %v365
        %597 = vmatprep.subr.mxu0 %v360
        %598 = vmatpush1.msra.mxu0 %v359
        %599 = vmatprep.subr.mxu0 %v354
        %600 = vmatpush1.msra.mxu0 %v353
        %601 = vmatprep.subr.mxu0 %v348
        %602 = vmatpush1.msra.mxu0 %v347
        %603 = vmatprep.subr.mxu0 %v534
        %604 = vmatpush2.msra.mxu0 %v533
        %605 = vmatprep.subr.mxu0 %v528
        %606 = vmatpush2.msra.mxu0 %v527
        %607 = vmatprep.subr.mxu0 %v522
        %608 = vmatpush2.msra.mxu0 %v521
        %609 = vmatprep.subr.mxu0 %v516
        %610 = vmatpush2.msra.mxu0 %v515
        %611 = vmatprep.subr.mxu0 %v510
        %612 = vmatpush2.msra.mxu0 %v509
        %613 = vmatprep.subr.mxu0 %v504
        %614 = vmatpush2.msra.mxu0 %v503
        %615 = vmatprep.subr.mxu0 %v498
        %616 = vmatpush2.msra.mxu0 %v497
        %617 = vmatprep.subr.mxu0 %v492
        %618 = vmatpush2.msra.mxu0 %v491
        %619 = vmatprep.subr.mxu0 %v486
        %620 = vmatpush2.msra.mxu0 %v485
        %621 = vmatprep.subr.mxu0 %v480
        %622 = vmatpush2.msra.mxu0 %v479
        %623 = vmatprep.subr.mxu0 %v474
        %624 = vmatpush2.msra.mxu0 %v473
        %625 = vmatprep.subr.mxu0 %v468
        %626 = vmatpush2.msra.mxu0 %v467
        %627 = vmatprep.subr.mxu0 %v462
        %628 = vmatpush2.msra.mxu0 %v461
        %629 = vmatprep.subr.mxu0 %v456
        %630 = vmatpush2.msra.mxu0 %v455
        %631 = vmatprep.subr.mxu0 %v450
        %632 = vmatpush2.msra.mxu0 %v449
        %633 = vmatprep.subr.mxu0 %v444
        %634 = vmatpush2.msra.mxu0 %v443
        %635 = vmatprep.mubr.f32.mxu0 %v316
        %636 = vmatmul.mubr.f32.gmra.mxu0 %v315
        %v637 = vpop.f32.mrf.mxu0
        %v638 = vadd.f32 %v544, %v637
        %v639 = vpop.f32.mrf.mxu0
        %v640 = vadd.f32 %v548, %v639
        %641 = vmatprep.mubr.f32.mxu0 %v318
        %642 = vmatmul.mubr.f32.gmra.mxu0 %v317
        %v643 = vpop.f32.mrf.mxu0
        %v644 = vadd.f32 %v544, %v643
        %v645 = vpop.f32.mrf.mxu0
        %v646 = vadd.f32 %v548, %v645
        %647 = vmatprep.mubr.f32.mxu0 %v320
        %648 = vmatmul.mubr.f32.gmra.mxu0 %v319
        %v649 = vpop.f32.mrf.mxu0
        %v650 = vadd.f32 %v544, %v649
        %v651 = vpop.f32.mrf.mxu0
        %v652 = vadd.f32 %v548, %v651
        %653 = vmatprep.mubr.f32.mxu0 %v322
        %654 = vmatmul.mubr.f32.gmra.mxu0 %v321
        %v655 = vpop.f32.mrf.mxu0
        %v656 = vadd.f32 %v544, %v655
        %v657 = vpop.f32.mrf.mxu0
        %v658 = vadd.f32 %v548, %v657
        %659 = vmatprep.mubr.f32.mxu0 %v324
        %660 = vmatmul.mubr.f32.gmra.mxu0 %v323
        %v661 = vpop.f32.mrf.mxu0
        %v662 = vadd.f32 %v544, %v661
        %v663 = vpop.f32.mrf.mxu0
        %v664 = vadd.f32 %v548, %v663
        %665 = vmatprep.mubr.f32.mxu0 %v326
        %666 = vmatmul.mubr.f32.gmra.mxu0 %v325
        %v667 = vpop.f32.mrf.mxu0
        %v668 = vadd.f32 %v544, %v667
        %v669 = vpop.f32.mrf.mxu0
        %v670 = vadd.f32 %v548, %v669
        %671 = vmatprep.mubr.f32.mxu0 %v328
        %672 = vmatmul.mubr.f32.gmra.mxu0 %v327
        %v673 = vpop.f32.mrf.mxu0
        %v674 = vadd.f32 %v544, %v673
        %v675 = vpop.f32.mrf.mxu0
        %v676 = vadd.f32 %v548, %v675
        %677 = vmatprep.mubr.f32.mxu0 %v330
        %678 = vmatmul.mubr.f32.gmra.mxu0 %v329
        %v679 = vpop.f32.mrf.mxu0
        %v680 = vadd.f32 %v544, %v679
        %v681 = vpop.f32.mrf.mxu0
        %v682 = vadd.f32 %v548, %v681
        %683 = vmatprep.mubr.f32.mxu0 %v332
        %684 = vmatmul.mubr.f32.gmra.mxu0 %v331
        %v685 = vpop.f32.mrf.mxu0
        %v686 = vadd.f32 %v544, %v685
        %v687 = vpop.f32.mrf.mxu0
        %v688 = vadd.f32 %v548, %v687
        %689 = vmatprep.mubr.f32.mxu0 %v334
        %690 = vmatmul.mubr.f32.gmra.mxu0 %v333
        %v691 = vpop.f32.mrf.mxu0
        %v692 = vadd.f32 %v544, %v691
        %v693 = vpop.f32.mrf.mxu0
        %v694 = vadd.f32 %v548, %v693
        %695 = vmatprep.mubr.f32.mxu0 %v336
        %696 = vmatmul.mubr.f32.gmra.mxu0 %v335
        %v697 = vpop.f32.mrf.mxu0
        %v698 = vadd.f32 %v544, %v697
        %v699 = vpop.f32.mrf.mxu0
        %v700 = vadd.f32 %v548, %v699
        %701 = vmatprep.mubr.f32.mxu0 %v338
        %702 = vmatmul.mubr.f32.gmra.mxu0 %v337
        %v703 = vpop.f32.mrf.mxu0
        %v704 = vadd.f32 %v544, %v703
        %v705 = vpop.f32.mrf.mxu0
        %v706 = vadd.f32 %v548, %v705
        %707 = vmatprep.mubr.f32.mxu0 %v340
        %708 = vmatmul.mubr.f32.gmra.mxu0 %v339
        %v709 = vpop.f32.mrf.mxu0
        %v710 = vadd.f32 %v544, %v709
        %v711 = vpop.f32.mrf.mxu0
        %v712 = vadd.f32 %v548, %v711
        %713 = vmatprep.mubr.f32.mxu0 %v342
        %714 = vmatmul.mubr.f32.gmra.mxu0 %v341
        %v715 = vpop.f32.mrf.mxu0
        %v716 = vadd.f32 %v544, %v715
        %v717 = vpop.f32.mrf.mxu0
        %v718 = vadd.f32 %v548, %v717
        %719 = vmatprep.mubr.f32.mxu0 %v344
        %720 = vmatmul.mubr.f32.gmra.mxu0 %v343
        %v721 = vpop.f32.mrf.mxu0
        %v722 = vadd.f32 %v544, %v721
        %v723 = vpop.f32.mrf.mxu0
        %v724 = vadd.f32 %v548, %v723
        %725 = vmatprep.mubr.f32.mxu0 %v346
        %726 = vmatmul.mubr.f32.gmra.mxu0 %v345
        %v727 = vpop.f32.mrf.mxu0
        %v728 = vadd.f32 %v544, %v727
        %v729 = vpop.f32.mrf.mxu0
        %v730 = vadd.f32 %v548, %v729
        %731 = vdwg.mxu0
        %732 = vmatprep.subr.mxu0 %v440
        %733 = vmatpush1.msra.mxu0 %v439
        %734 = vmatprep.subr.mxu0 %v434
        %735 = vmatpush1.msra.mxu0 %v433
        %736 = vmatprep.subr.mxu0 %v428
        %737 = vmatpush1.msra.mxu0 %v427
        %738 = vmatprep.subr.mxu0 %v422
        %739 = vmatpush1.msra.mxu0 %v421
        %740 = vmatprep.subr.mxu0 %v416
        %741 = vmatpush1.msra.mxu0 %v415
        %742 = vmatprep.subr.mxu0 %v410
        %743 = vmatpush1.msra.mxu0 %v409
        %744 = vmatprep.subr.mxu0 %v404
        %745 = vmatpush1.msra.mxu0 %v403
        %746 = vmatprep.subr.mxu0 %v398
        %747 = vmatpush1.msra.mxu0 %v397
        %748 = vmatprep.subr.mxu0 %v392
        %749 = vmatpush1.msra.mxu0 %v391
        %750 = vmatprep.subr.mxu0 %v386
        %751 = vmatpush1.msra.mxu0 %v385
        %752 = vmatprep.subr.mxu0 %v380
        %753 = vmatpush1.msra.mxu0 %v379
        %754 = vmatprep.subr.mxu0 %v374
        %755 = vmatpush1.msra.mxu0 %v373
        %756 = vmatprep.subr.mxu0 %v368
        %757 = vmatpush1.msra.mxu0 %v367
        %758 = vmatprep.subr.mxu0 %v362
        %759 = vmatpush1.msra.mxu0 %v361
        %760 = vmatprep.subr.mxu0 %v356
        %761 = vmatpush1.msra.mxu0 %v355
        %762 = vmatprep.subr.mxu0 %v350
        %763 = vmatpush1.msra.mxu0 %v349
        %764 = vmatprep.subr.mxu0 %v536
        %765 = vmatpush2.msra.mxu0 %v535
        %766 = vmatprep.subr.mxu0 %v530
        %767 = vmatpush2.msra.mxu0 %v529
        %768 = vmatprep.subr.mxu0 %v524
        %769 = vmatpush2.msra.mxu0 %v523
        %770 = vmatprep.subr.mxu0 %v518
        %771 = vmatpush2.msra.mxu0 %v517
        %772 = vmatprep.subr.mxu0 %v512
        %773 = vmatpush2.msra.mxu0 %v511
        %774 = vmatprep.subr.mxu0 %v506
        %775 = vmatpush2.msra.mxu0 %v505
        %776 = vmatprep.subr.mxu0 %v500
        %777 = vmatpush2.msra.mxu0 %v499
        %778 = vmatprep.subr.mxu0 %v494
        %779 = vmatpush2.msra.mxu0 %v493
        %780 = vmatprep.subr.mxu0 %v488
        %781 = vmatpush2.msra.mxu0 %v487
        %782 = vmatprep.subr.mxu0 %v482
        %783 = vmatpush2.msra.mxu0 %v481
        %784 = vmatprep.subr.mxu0 %v476
        %785 = vmatpush2.msra.mxu0 %v475
        %786 = vmatprep.subr.mxu0 %v470
        %787 = vmatpush2.msra.mxu0 %v469
        %788 = vmatprep.subr.mxu0 %v464
        %789 = vmatpush2.msra.mxu0 %v463
        %790 = vmatprep.subr.mxu0 %v458
        %791 = vmatpush2.msra.mxu0 %v457
        %792 = vmatprep.subr.mxu0 %v452
        %793 = vmatpush2.msra.mxu0 %v451
        %794 = vmatprep.subr.mxu0 %v446
        %795 = vmatpush2.msra.mxu0 %v445
        %796 = vmatprep.mubr.f32.mxu0 %v316
        %797 = vmatmul.mubr.f32.gmra.mxu0 %v315
        %v798 = vpop.f32.mrf.mxu0
        %v799 = vadd.f32 %v552, %v798
        %v800 = vpop.f32.mrf.mxu0
        %v801 = vadd.f32 %v556, %v800
        %802 = vmatprep.mubr.f32.mxu0 %v318
        %803 = vmatmul.mubr.f32.gmra.mxu0 %v317
        %v804 = vpop.f32.mrf.mxu0
        %v805 = vadd.f32 %v552, %v804
        %v806 = vpop.f32.mrf.mxu0
        %v807 = vadd.f32 %v556, %v806
        %808 = vmatprep.mubr.f32.mxu0 %v320
        %809 = vmatmul.mubr.f32.gmra.mxu0 %v319
        %v810 = vpop.f32.mrf.mxu0
        %v811 = vadd.f32 %v552, %v810
        %v812 = vpop.f32.mrf.mxu0
        %v813 = vadd.f32 %v556, %v812
        %814 = vmatprep.mubr.f32.mxu0 %v322
        %815 = vmatmul.mubr.f32.gmra.mxu0 %v321
        %v816 = vpop.f32.mrf.mxu0
        %v817 = vadd.f32 %v552, %v816
        %v818 = vpop.f32.mrf.mxu0
        %v819 = vadd.f32 %v556, %v818
        %820 = vmatprep.mubr.f32.mxu0 %v324
        %821 = vmatmul.mubr.f32.gmra.mxu0 %v323
        %v822 = vpop.f32.mrf.mxu0
        %v823 = vadd.f32 %v552, %v822
        %v824 = vpop.f32.mrf.mxu0
        %v825 = vadd.f32 %v556, %v824
        %826 = vmatprep.mubr.f32.mxu0 %v326
        %827 = vmatmul.mubr.f32.gmra.mxu0 %v325
        %v828 = vpop.f32.mrf.mxu0
        %v829 = vadd.f32 %v552, %v828
        %v830 = vpop.f32.mrf.mxu0
        %v831 = vadd.f32 %v556, %v830
        %832 = vmatprep.mubr.f32.mxu0 %v328
        %833 = vmatmul.mubr.f32.gmra.mxu0 %v327
        %v834 = vpop.f32.mrf.mxu0
        %v835 = vadd.f32 %v552, %v834
        %v836 = vpop.f32.mrf.mxu0
        %v837 = vadd.f32 %v556, %v836
        %838 = vmatprep.mubr.f32.mxu0 %v330
        %839 = vmatmul.mubr.f32.gmra.mxu0 %v329
        %v840 = vpop.f32.mrf.mxu0
        %v841 = vadd.f32 %v552, %v840
        %v842 = vpop.f32.mrf.mxu0
        %v843 = vadd.f32 %v556, %v842
        %844 = vmatprep.mubr.f32.mxu0 %v332
        %845 = vmatmul.mubr.f32.gmra.mxu0 %v331
        %v846 = vpop.f32.mrf.mxu0
        %v847 = vadd.f32 %v552, %v846
        %v848 = vpop.f32.mrf.mxu0
        %v849 = vadd.f32 %v556, %v848
        %850 = vmatprep.mubr.f32.mxu0 %v334
        %851 = vmatmul.mubr.f32.gmra.mxu0 %v333
        %v852 = vpop.f32.mrf.mxu0
        %v853 = vadd.f32 %v552, %v852
        %v854 = vpop.f32.mrf.mxu0
        %v855 = vadd.f32 %v556, %v854
        %856 = vmatprep.mubr.f32.mxu0 %v336
        %857 = vmatmul.mubr.f32.gmra.mxu0 %v335
        %v858 = vpop.f32.mrf.mxu0
        %v859 = vadd.f32 %v552, %v858
        %v860 = vpop.f32.mrf.mxu0
        %v861 = vadd.f32 %v556, %v860
        %862 = vmatprep.mubr.f32.mxu0 %v338
        %863 = vmatmul.mubr.f32.gmra.mxu0 %v337
        %v864 = vpop.f32.mrf.mxu0
        %v865 = vadd.f32 %v552, %v864
        %v866 = vpop.f32.mrf.mxu0
        %v867 = vadd.f32 %v556, %v866
        %868 = vmatprep.mubr.f32.mxu0 %v340
        %869 = vmatmul.mubr.f32.gmra.mxu0 %v339
        %v870 = vpop.f32.mrf.mxu0
        %v871 = vadd.f32 %v552, %v870
        %v872 = vpop.f32.mrf.mxu0
        %v873 = vadd.f32 %v556, %v872
        %874 = vmatprep.mubr.f32.mxu0 %v342
        %875 = vmatmul.mubr.f32.gmra.mxu0 %v341
        %v876 = vpop.f32.mrf.mxu0
        %v877 = vadd.f32 %v552, %v876
        %v878 = vpop.f32.mrf.mxu0
        %v879 = vadd.f32 %v556, %v878
        %880 = vmatprep.mubr.f32.mxu0 %v344
        %881 = vmatmul.mubr.f32.gmra.mxu0 %v343
        %v882 = vpop.f32.mrf.mxu0
        %v883 = vadd.f32 %v552, %v882
        %v884 = vpop.f32.mrf.mxu0
        %v885 = vadd.f32 %v556, %v884
        %886 = vmatprep.mubr.f32.mxu0 %v346
        %887 = vmatmul.mubr.f32.gmra.mxu0 %v345
        %v888 = vpop.f32.mrf.mxu0
        %v889 = vadd.f32 %v552, %v888
        %v890 = vpop.f32.mrf.mxu0
        %v891 = vadd.f32 %v556, %v890
        %892 = vdwg.mxu0
        %893 = vmatprep.subr.mxu0 %v442
        %894 = vmatpush1.msra.mxu0 %v441
        %895 = vmatprep.subr.mxu0 %v436
        %896 = vmatpush1.msra.mxu0 %v435
        %897 = vmatprep.subr.mxu0 %v430
        %898 = vmatpush1.msra.mxu0 %v429
        %899 = vmatprep.subr.mxu0 %v424
        %900 = vmatpush1.msra.mxu0 %v423
        %901 = vmatprep.subr.mxu0 %v418
        %902 = vmatpush1.msra.mxu0 %v417
        %903 = vmatprep.subr.mxu0 %v412
        %904 = vmatpush1.msra.mxu0 %v411
        %905 = vmatprep.subr.mxu0 %v406
        %906 = vmatpush1.msra.mxu0 %v405
        %907 = vmatprep.subr.mxu0 %v400
        %908 = vmatpush1.msra.mxu0 %v399
        %909 = vmatprep.subr.mxu0 %v394
        %910 = vmatpush1.msra.mxu0 %v393
        %911 = vmatprep.subr.mxu0 %v388
        %912 = vmatpush1.msra.mxu0 %v387
        %913 = vmatprep.subr.mxu0 %v382
        %914 = vmatpush1.msra.mxu0 %v381
        %915 = vmatprep.subr.mxu0 %v376
        %916 = vmatpush1.msra.mxu0 %v375
        %917 = vmatprep.subr.mxu0 %v370
        %918 = vmatpush1.msra.mxu0 %v369
        %919 = vmatprep.subr.mxu0 %v364
        %920 = vmatpush1.msra.mxu0 %v363
        %921 = vmatprep.subr.mxu0 %v358
        %922 = vmatpush1.msra.mxu0 %v357
        %923 = vmatprep.subr.mxu0 %v352
        %924 = vmatpush1.msra.mxu0 %v351
        %925 = vmatprep.subr.mxu0 %v538
        %926 = vmatpush2.msra.mxu0 %v537
        %927 = vmatprep.subr.mxu0 %v532
        %928 = vmatpush2.msra.mxu0 %v531
        %929 = vmatprep.subr.mxu0 %v526
        %930 = vmatpush2.msra.mxu0 %v525
        %931 = vmatprep.subr.mxu0 %v520
        %932 = vmatpush2.msra.mxu0 %v519
        %933 = vmatprep.subr.mxu0 %v514
        %934 = vmatpush2.msra.mxu0 %v513
        %935 = vmatprep.subr.mxu0 %v508
        %936 = vmatpush2.msra.mxu0 %v507
        %937 = vmatprep.subr.mxu0 %v502
        %938 = vmatpush2.msra.mxu0 %v501
        %939 = vmatprep.subr.mxu0 %v496
        %940 = vmatpush2.msra.mxu0 %v495
        %941 = vmatprep.subr.mxu0 %v490
        %942 = vmatpush2.msra.mxu0 %v489
        %943 = vmatprep.subr.mxu0 %v484
        %944 = vmatpush2.msra.mxu0 %v483
        %945 = vmatprep.subr.mxu0 %v478
        %946 = vmatpush2.msra.mxu0 %v477
        %947 = vmatprep.subr.mxu0 %v472
        %948 = vmatpush2.msra.mxu0 %v471
        %949 = vmatprep.subr.mxu0 %v466
        %950 = vmatpush2.msra.mxu0 %v465
        %951 = vmatprep.subr.mxu0 %v460
        %952 = vmatpush2.msra.mxu0 %v459
        %953 = vmatprep.subr.mxu0 %v454
        %954 = vmatpush2.msra.mxu0 %v453
        %955 = vmatprep.subr.mxu0 %v448
        %956 = vmatpush2.msra.mxu0 %v447
        %957 = vmatprep.mubr.f32.mxu0 %v316
        %958 = vmatmul.mubr.f32.gmra.mxu0 %v315
        %v959 = vpop.f32.mrf.mxu0
        %v960 = vadd.f32 %v560, %v959
        %v961 = vpop.f32.mrf.mxu0
        %v962 = vadd.f32 %v564, %v961
        %963 = vmatprep.mubr.f32.mxu0 %v318
        %964 = vmatmul.mubr.f32.gmra.mxu0 %v317
        %v965 = vpop.f32.mrf.mxu0
        %v966 = vadd.f32 %v560, %v965
        %v967 = vpop.f32.mrf.mxu0
        %v968 = vadd.f32 %v564, %v967
        %969 = vmatprep.mubr.f32.mxu0 %v320
        %970 = vmatmul.mubr.f32.gmra.mxu0 %v319
        %v971 = vpop.f32.mrf.mxu0
        %v972 = vadd.f32 %v560, %v971
        %v973 = vpop.f32.mrf.mxu0
        %v974 = vadd.f32 %v564, %v973
        %975 = vmatprep.mubr.f32.mxu0 %v322
        %976 = vmatmul.mubr.f32.gmra.mxu0 %v321
        %v977 = vpop.f32.mrf.mxu0
        %v978 = vadd.f32 %v560, %v977
        %v979 = vpop.f32.mrf.mxu0
        %v980 = vadd.f32 %v564, %v979
        %981 = vmatprep.mubr.f32.mxu0 %v324
        %982 = vmatmul.mubr.f32.gmra.mxu0 %v323
        %v983 = vpop.f32.mrf.mxu0
        %v984 = vadd.f32 %v560, %v983
        %v985 = vpop.f32.mrf.mxu0
        %v986 = vadd.f32 %v564, %v985
        %987 = vmatprep.mubr.f32.mxu0 %v326
        %988 = vmatmul.mubr.f32.gmra.mxu0 %v325
        %v989 = vpop.f32.mrf.mxu0
        %v990 = vadd.f32 %v560, %v989
        %v991 = vpop.f32.mrf.mxu0
        %v992 = vadd.f32 %v564, %v991
        %993 = vmatprep.mubr.f32.mxu0 %v328
        %994 = vmatmul.mubr.f32.gmra.mxu0 %v327
        %v995 = vpop.f32.mrf.mxu0
        %v996 = vadd.f32 %v560, %v995
        %v997 = vpop.f32.mrf.mxu0
        %v998 = vadd.f32 %v564, %v997
        %999 = vmatprep.mubr.f32.mxu0 %v330
        %1000 = vmatmul.mubr.f32.gmra.mxu0 %v329
        %v1001 = vpop.f32.mrf.mxu0
        %v1002 = vadd.f32 %v560, %v1001
        %v1003 = vpop.f32.mrf.mxu0
        %v1004 = vadd.f32 %v564, %v1003
        %1005 = vmatprep.mubr.f32.mxu0 %v332
        %1006 = vmatmul.mubr.f32.gmra.mxu0 %v331
        %v1007 = vpop.f32.mrf.mxu0
        %v1008 = vadd.f32 %v560, %v1007
        %v1009 = vpop.f32.mrf.mxu0
        %v1010 = vadd.f32 %v564, %v1009
        %1011 = vmatprep.mubr.f32.mxu0 %v334
        %1012 = vmatmul.mubr.f32.gmra.mxu0 %v333
        %v1013 = vpop.f32.mrf.mxu0
        %v1014 = vadd.f32 %v560, %v1013
        %v1015 = vpop.f32.mrf.mxu0
        %v1016 = vadd.f32 %v564, %v1015
        %1017 = vmatprep.mubr.f32.mxu0 %v336
        %1018 = vmatmul.mubr.f32.gmra.mxu0 %v335
        %v1019 = vpop.f32.mrf.mxu0
        %v1020 = vadd.f32 %v560, %v1019
        %v1021 = vpop.f32.mrf.mxu0
        %v1022 = vadd.f32 %v564, %v1021
        %1023 = vmatprep.mubr.f32.mxu0 %v338
        %1024 = vmatmul.mubr.f32.gmra.mxu0 %v337
        %v1025 = vpop.f32.mrf.mxu0
        %v1026 = vadd.f32 %v560, %v1025
        %v1027 = vpop.f32.mrf.mxu0
        %v1028 = vadd.f32 %v564, %v1027
        %1029 = vmatprep.mubr.f32.mxu0 %v340
        %1030 = vmatmul.mubr.f32.gmra.mxu0 %v339
        %v1031 = vpop.f32.mrf.mxu0
        %v1032 = vadd.f32 %v560, %v1031
        %v1033 = vpop.f32.mrf.mxu0
        %v1034 = vadd.f32 %v564, %v1033
        %1035 = vmatprep.mubr.f32.mxu0 %v342
        %1036 = vmatmul.mubr.f32.gmra.mxu0 %v341
        %v1037 = vpop.f32.mrf.mxu0
        %v1038 = vadd.f32 %v560, %v1037
        %v1039 = vpop.f32.mrf.mxu0
        %v1040 = vadd.f32 %v564, %v1039
        %1041 = vmatprep.mubr.f32.mxu0 %v344
        %1042 = vmatmul.mubr.f32.gmra.mxu0 %v343
        %v1043 = vpop.f32.mrf.mxu0
        %v1044 = vadd.f32 %v560, %v1043
        %v1045 = vpop.f32.mrf.mxu0
        %v1046 = vadd.f32 %v564, %v1045
        %1047 = vmatprep.mubr.f32.mxu0 %v346
        %1048 = vmatmul.mubr.f32.gmra.mxu0 %v345
        %v1049 = vpop.f32.mrf.mxu0
        %v1050 = vadd.f32 %v560, %v1049
        %v1051 = vpop.f32.mrf.mxu0
        %v1052 = vadd.f32 %v564, %v1051
        %1053 = vdwg.mxu0
        %1054 = vst [vmem:[%s296] sm:$0xff] %v638
        %1055 = vst [vmem:[%s296 + $0x8] sm:$0xff] %v640
        %1056 = vst [vmem:[%s296 + $0x10] sm:$0xff] %v644
        %1057 = vst [vmem:[%s296 + $0x18] sm:$0xff] %v646
        %1058 = vst [vmem:[%s296 + $0x20] sm:$0xff] %v650
        %1059 = vst [vmem:[%s296 + $0x28] sm:$0xff] %v652
        %1060 = vst [vmem:[%s296 + $0x30] sm:$0xff] %v656
        %1061 = vst [vmem:[%s296 + $0x38] sm:$0xff] %v658
        %1062 = vst [vmem:[%s296 + $0x40] sm:$0xff] %v662
        %1063 = vst [vmem:[%s296 + $0x48] sm:$0xff] %v664
        %1064 = vst [vmem:[%s296 + $0x50] sm:$0xff] %v668
        %1065 = vst [vmem:[%s296 + $0x58] sm:$0xff] %v670
        %1066 = vst [vmem:[%s296 + $0x60] sm:$0xff] %v674
        %1067 = vst [vmem:[%s296 + $0x68] sm:$0xff] %v676
        %1068 = vst [vmem:[%s296 + $0x70] sm:$0xff] %v680
        %1069 = vst [vmem:[%s296 + $0x78] sm:$0xff] %v682
        %1070 = vst [vmem:[%s296 + $0x80] sm:$0xff] %v686
        %1071 = vst [vmem:[%s296 + $0x88] sm:$0xff] %v688
        %1072 = vst [vmem:[%s296 + $0x90] sm:$0xff] %v692
        %1073 = vst [vmem:[%s296 + $0x98] sm:$0xff] %v694
        %1074 = vst [vmem:[%s296 + $0xa0] sm:$0xff] %v698
        %1075 = vst [vmem:[%s296 + $0xa8] sm:$0xff] %v700
        %1076 = vst [vmem:[%s296 + $0xb0] sm:$0xff] %v704
        %1077 = vst [vmem:[%s296 + $0xb8] sm:$0xff] %v706
        %1078 = vst [vmem:[%s296 + $0xc0] sm:$0xff] %v710
        %1079 = vst [vmem:[%s296 + $0xc8] sm:$0xff] %v712
        %1080 = vst [vmem:[%s296 + $0xd0] sm:$0xff] %v716
        %1081 = vst [vmem:[%s296 + $0xd8] sm:$0xff] %v718
        %1082 = vst [vmem:[%s296 + $0xe0] sm:$0xff] %v722
        %1083 = vst [vmem:[%s296 + $0xe8] sm:$0xff] %v724
        %1084 = vst [vmem:[%s296 + $0xf0] sm:$0xff] %v728
        %1085 = vst [vmem:[%s296 + $0xf8] sm:$0xff] %v730
        %1086 = vst [vmem:[%s303] sm:$0xff] %v799
        %1087 = vst [vmem:[%s303 + $0x8] sm:$0xff] %v801
        %1088 = vst [vmem:[%s303 + $0x10] sm:$0xff] %v805
        %1089 = vst [vmem:[%s303 + $0x18] sm:$0xff] %v807
        %1090 = vst [vmem:[%s303 + $0x20] sm:$0xff] %v811
        %1091 = vst [vmem:[%s303 + $0x28] sm:$0xff] %v813
        %1092 = vst [vmem:[%s303 + $0x30] sm:$0xff] %v817
        %1093 = vst [vmem:[%s303 + $0x38] sm:$0xff] %v819
        %1094 = vst [vmem:[%s303 + $0x40] sm:$0xff] %v823
        %1095 = vst [vmem:[%s303 + $0x48] sm:$0xff] %v825
        %1096 = vst [vmem:[%s303 + $0x50] sm:$0xff] %v829
        %1097 = vst [vmem:[%s303 + $0x58] sm:$0xff] %v831
        %1098 = vst [vmem:[%s303 + $0x60] sm:$0xff] %v835
        %1099 = vst [vmem:[%s303 + $0x68] sm:$0xff] %v837
        %1100 = vst [vmem:[%s303 + $0x70] sm:$0xff] %v841
        %1101 = vst [vmem:[%s303 + $0x78] sm:$0xff] %v843
        %1102 = vst [vmem:[%s303 + $0x80] sm:$0xff] %v847
        %1103 = vst [vmem:[%s303 + $0x88] sm:$0xff] %v849
        %1104 = vst [vmem:[%s303 + $0x90] sm:$0xff] %v853
        %1105 = vst [vmem:[%s303 + $0x98] sm:$0xff] %v855
        %1106 = vst [vmem:[%s303 + $0xa0] sm:$0xff] %v859
        %1107 = vst [vmem:[%s303 + $0xa8] sm:$0xff] %v861
        %1108 = vst [vmem:[%s303 + $0xb0] sm:$0xff] %v865
        %1109 = vst [vmem:[%s303 + $0xb8] sm:$0xff] %v867
        %1110 = vst [vmem:[%s303 + $0xc0] sm:$0xff] %v871
        %1111 = vst [vmem:[%s303 + $0xc8] sm:$0xff] %v873
        %1112 = vst [vmem:[%s303 + $0xd0] sm:$0xff] %v877
        %1113 = vst [vmem:[%s303 + $0xd8] sm:$0xff] %v879
        %1114 = vst [vmem:[%s303 + $0xe0] sm:$0xff] %v883
        %1115 = vst [vmem:[%s303 + $0xe8] sm:$0xff] %v885
        %1116 = vst [vmem:[%s303 + $0xf0] sm:$0xff] %v889
        %1117 = vst [vmem:[%s303 + $0xf8] sm:$0xff] %v891
        %1118 = vst [vmem:[%s310] sm:$0xff] %v960
        %1119 = vst [vmem:[%s310 + $0x8] sm:$0xff] %v962
        %1120 = vst [vmem:[%s310 + $0x10] sm:$0xff] %v966
        %1121 = vst [vmem:[%s310 + $0x18] sm:$0xff] %v968
        %1122 = vst [vmem:[%s310 + $0x20] sm:$0xff] %v972
        %1123 = vst [vmem:[%s310 + $0x28] sm:$0xff] %v974
        %1124 = vst [vmem:[%s310 + $0x30] sm:$0xff] %v978
        %1125 = vst [vmem:[%s310 + $0x38] sm:$0xff] %v980
        %1126 = vst [vmem:[%s310 + $0x40] sm:$0xff] %v984
        %1127 = vst [vmem:[%s310 + $0x48] sm:$0xff] %v986
        %1128 = vst [vmem:[%s310 + $0x50] sm:$0xff] %v990
        %1129 = vst [vmem:[%s310 + $0x58] sm:$0xff] %v992
        %1130 = vst [vmem:[%s310 + $0x60] sm:$0xff] %v996
        %1131 = vst [vmem:[%s310 + $0x68] sm:$0xff] %v998
        %1132 = vst [vmem:[%s310 + $0x70] sm:$0xff] %v1002
        %1133 = vst [vmem:[%s310 + $0x78] sm:$0xff] %v1004
        %1134 = vst [vmem:[%s310 + $0x80] sm:$0xff] %v1008
        %1135 = vst [vmem:[%s310 + $0x88] sm:$0xff] %v1010
        %1136 = vst [vmem:[%s310 + $0x90] sm:$0xff] %v1014
        %1137 = vst [vmem:[%s310 + $0x98] sm:$0xff] %v1016
        %1138 = vst [vmem:[%s310 + $0xa0] sm:$0xff] %v1020
        %1139 = vst [vmem:[%s310 + $0xa8] sm:$0xff] %v1022
        %1140 = vst [vmem:[%s310 + $0xb0] sm:$0xff] %v1026
        %1141 = vst [vmem:[%s310 + $0xb8] sm:$0xff] %v1028
        %1142 = vst [vmem:[%s310 + $0xc0] sm:$0xff] %v1032
        %1143 = vst [vmem:[%s310 + $0xc8] sm:$0xff] %v1034
        %1144 = vst [vmem:[%s310 + $0xd0] sm:$0xff] %v1038
        %1145 = vst [vmem:[%s310 + $0xd8] sm:$0xff] %v1040
        %1146 = vst [vmem:[%s310 + $0xe0] sm:$0xff] %v1044
        %1147 = vst [vmem:[%s310 + $0xe8] sm:$0xff] %v1046
        %1148 = vst [vmem:[%s310 + $0xf0] sm:$0xff] %v1050
        %1149 = vst [vmem:[%s310 + $0xf8] sm:$0xff] %v1052
        %s1150 = sand.u32 %s119, 1
        %s1151 = scalar_lea.sflag [#allocation4], %s1150
        %s1152 = sand.u32 %s119, 1
        %s1153 = smul.addr %s1152, 256
        %s1154 = scalar_lea.vmem [#allocation8], %s1153
        %s1155 = sand.u32 %s27, 1
        %s1156 = scalar_lea.sflag [#allocation10], %s1155
        %s1157 = sand.u32 %s147, 1
        %s1158 = smul.addr %s1157, 256
        %s1159 = scalar_lea.vmem [#allocation9], %s1158
        %s1160 = sand.u32 %s27, 1
        %s1161 = scalar_lea.sflag [#allocation10], %s1160
        %s1162 = sand.u32 %s175, 1
        %s1163 = smul.addr %s1162, 256
        %s1164 = scalar_lea.vmem [#allocation11], %s1163
        // Predicated region
        $region45: #{tpu_custom_call.1} parent=31 // pred_check
          %p1165 = pneg %p129
        $region46: #{tpu_custom_call.1} parent=31 // pred_check_branch
          %1167 = sbr.rel (%p1165) target = $region48
        $region47: #{tpu_custom_call.1} parent=31 // pred_region
          %s1168 = smul.u32 16, %s32
          %s1170 = ssub.s32 4096, 4096
          %1171 = vsyncadd %s1151, %s1170
          %s1172 = smul.addr %s1168, 2
          %s1173 = smul.addr %s31, 32
          %s1174 = sadd.s32 %s1172, %s1173
          %s1175 = smul.addr %s1174, 128
          %s1176 = scalar_lea.hbm %s3, %s1175
          %s1177 = sshll.u32 %s1154, 4
          %s1178 = int_to_ptr.vmem [resolvable:$true] %s1177
          %1183 = dma.vmem_to_hbm [thread:$0]  %s1178, 4096, %s1176, %s1151, 256, 256, 16
        $region48: #{tpu_custom_call.1} parent=31 // pred_fallthru
          _
        // Predicated region
        $region49: #{tpu_custom_call.1} parent=31 // pred_check
          %p1184 = pneg %p157
        $region50: #{tpu_custom_call.1} parent=31 // pred_check_branch
          %1186 = sbr.rel (%p1184) target = $region52
        $region51: #{tpu_custom_call.1} parent=31 // pred_region
          %s1187 = smul.u32 16, %s32
          %s1189 = ssub.s32 4096, 4096
          %1190 = vsyncadd %s1156, %s1189
          %s1191 = smul.addr %s1187, 2
          %s1192 = smul.addr %s31, 32
          %s1193 = sadd.s32 %s1191, %s1192
          %s1194 = smul.addr %s1193, 128
          %s1195 = scalar_lea.hbm %s4, %s1194
          %s1196 = sshll.u32 %s1159, 4
          %s1197 = int_to_ptr.vmem [resolvable:$true] %s1196
          %1202 = dma.vmem_to_hbm [thread:$0]  %s1197, 4096, %s1195, %s1156, 256, 256, 16
        $region52: #{tpu_custom_call.1} parent=31 // pred_fallthru
          _
        // Predicated region
        $region53: #{tpu_custom_call.1} parent=31 // pred_check
          %p1203 = pneg %p185
        $region54: #{tpu_custom_call.1} parent=31 // pred_check_branch
          %1205 = sbr.rel (%p1203) target = $region56
        $region55: #{tpu_custom_call.1} parent=31 // pred_region
          %s1206 = smul.u32 16, %s32
          %s1208 = ssub.s32 4096, 4096
          %1209 = vsyncadd %s1161, %s1208
          %s1210 = smul.addr %s1206, 2
          %s1211 = smul.addr %s31, 32
          %s1212 = sadd.s32 %s1210, %s1211
          %s1213 = smul.addr %s1212, 128
          %s1214 = scalar_lea.hbm %s5, %s1213
          %s1215 = sshll.u32 %s1164, 4
          %s1216 = int_to_ptr.vmem [resolvable:$true] %s1215
          %1221 = dma.vmem_to_hbm [thread:$0]  %s1216, 4096, %s1214, %s1161, 256, 256, 16
        $region56: #{tpu_custom_call.1} parent=31 // pred_fallthru
          _
      $region32: #{tpu_custom_call.1} parent=5 // pred_fallthru
        _
      %p1222 = scmp.le.s32.totalorder 2, %s22
      // Predicated region
      $region57: #{tpu_custom_call.1} parent=5 // pred_check
        %p1223 = pneg %p1222
      $region58: #{tpu_custom_call.1} parent=5 // pred_check_branch
        %1225 = sbr.rel (%p1223) target = $region60
      $region59: #{tpu_custom_call.1} parent=5 // pred_region
        %s1226 = ssub.s32 %s22, 2
        // Predicated region
        $region61: #{tpu_custom_call.1} parent=59 // pred_check
          %p1227 = pneg %p135
        $region62: #{tpu_custom_call.1} parent=59 // pred_check_branch
          %1229 = sbr.rel (%p1227) target = $region64
        $region63: #{tpu_custom_call.1} parent=59 // pred_region
          %s1230 = sand.u32 %s120, 1
          %s1231 = scalar_lea.sflag [#allocation4], %s1230
          %s1232 = sand.u32 %s120, 1
          %s1233 = smul.addr %s1232, 256
          %s1234 = scalar_lea.vmem [#allocation8], %s1233
          %1235 = dma.done %s1231, 4096
        $region64: #{tpu_custom_call.1} parent=59 // pred_fallthru
          _
        // Predicated region
        $region65: #{tpu_custom_call.1} parent=59 // pred_check
          %p1236 = pneg %p163
        $region66: #{tpu_custom_call.1} parent=59 // pred_check_branch
          %1238 = sbr.rel (%p1236) target = $region68
        $region67: #{tpu_custom_call.1} parent=59 // pred_region
          %s1239 = sand.u32 %s28, 1
          %s1240 = scalar_lea.sflag [#allocation10], %s1239
          %s1241 = sand.u32 %s148, 1
          %s1242 = smul.addr %s1241, 256
          %s1243 = scalar_lea.vmem [#allocation9], %s1242
          %1244 = dma.done %s1240, 4096
        $region68: #{tpu_custom_call.1} parent=59 // pred_fallthru
          _
        // Predicated region
        $region69: #{tpu_custom_call.1} parent=59 // pred_check
          %p1245 = pneg %p191
        $region70: #{tpu_custom_call.1} parent=59 // pred_check_branch
          %1247 = sbr.rel (%p1245) target = $region72
        $region71: #{tpu_custom_call.1} parent=59 // pred_region
          %s1248 = sand.u32 %s28, 1
          %s1249 = scalar_lea.sflag [#allocation10], %s1248
          %s1250 = sand.u32 %s176, 1
          %s1251 = smul.addr %s1250, 256
          %s1252 = scalar_lea.vmem [#allocation11], %s1251
          %1253 = dma.done %s1249, 4096
        $region72: #{tpu_custom_call.1} parent=59 // pred_fallthru
          _
      $region60: #{tpu_custom_call.1} parent=5 // pred_fallthru
        _
    $region6: #{tpu_custom_call.1} parent=1 // loop_footer
      %s26 = sadd.s32 1, %s22
    $region7: #{tpu_custom_call.1} parent=1 // loop_footer_branch
      %21 = sbr.rel target = $region3
    $region8: #{tpu_custom_call.1} parent=1 // loop_exit
      _
    %1254 = vsyncpa [#allocation3], 1
    %s1255 = scalar_lea.sflag [#allocation3], 1
    %1256 = vsyncpa %s1255, 1
    %1257 = vsyncpa [#allocation6], 1
    %1258 = vsyncpa [#allocation4], 1
    %s1259 = scalar_lea.sflag [#allocation4], 1
    %1260 = vsyncpa %s1259, 1
    %1261 = vsyncpa [#allocation10], 1
    %s1262 = scalar_lea.sflag [#allocation10], 1
    %1263 = vsyncpa %s1262, 1

</llo_original>
